<compile_context>
chip_gen: v5e
topology: v5e:2x2
jax: 0.10.0
libtpu: 0.0.40
codegen_flags: <defaults>
</compile_context>

<pallas_src>
import functools

import numpy as np
import jax
import jax.numpy as jnp
from jax import lax
from jax.experimental import pallas as pl
from jax.experimental.pallas import tpu as pltpu

_VMEM = pl.BlockSpec(memory_space=pltpu.MemorySpace.VMEM)


# -----------------------------------------------------------------------------
# Kernel 1: ConvTranspose2d(kernel=2, stride=2) as one lane-dense matmul.
#   out[co*4 + ky*2 + kx, n*H*W + y*W + x]
#       = bt[co] + sum_ci wt[ci, co, ky, kx] * x[n, ci, y, x]
# -----------------------------------------------------------------------------
def _convt_kernel(x_ref, w_ref, b_ref, o_ref):
    o_ref[...] = (
        jnp.dot(w_ref[...], x_ref[...], preferred_element_type=jnp.float32)
        + b_ref[...])


def conv_transpose_2x2(x_nchw, wt, bt):
    N, Ci, H, W = x_nchw.shape
    xf = jnp.transpose(x_nchw, (1, 0, 2, 3)).reshape(Ci, N * H * W)   # lanes dense
    w2 = jnp.transpose(wt, (1, 2, 3, 0)).reshape(Ci * 4, Ci)          # (co,ky,kx) x ci
    b2 = jnp.repeat(bt, 4).reshape(Ci * 4, 1)

    out = pl.pallas_call(
        _convt_kernel,
        out_shape=jax.ShapeDtypeStruct((Ci * 4, N * H * W), jnp.float32),
        in_specs=[_VMEM, _VMEM, _VMEM],
        out_specs=_VMEM,
    )(xf, w2, b2)

    # TODO(synk): the 2x2 sub-pixel interleave is a strided scatter with no clean
    # BlockSpec / in-kernel expression, so it stays as cheap XLA glue on this
    # ~17 KiB tensor (one pass), instead of a full padded-lane Pallas round trip.
    y = out.reshape(Ci, 2, 2, N, H, W).transpose(0, 3, 4, 1, 5, 2)
    return y.reshape(Ci, N, 2 * H, 2 * W)                             # (Ci,N,2H,2W)


# -----------------------------------------------------------------------------
# Kernel 2: fused ConvBlock.
# Activations are (8 channels x flattened padded spatial) with spatial in lanes.
# A 3x3 'same' conv becomes 9 shifted lane-slices (in-kernel im2col) each hit by
# a tiny (8,8) weight matmul; BN batch stats + affine + ReLU are fused epilogues.
# -----------------------------------------------------------------------------
def _convblock_kernel(h0_ref, m1_ref, w1_ref, b1_ref, g1_ref, be1_ref,
                      w2_ref, b2_ref, g2_ref, be2_ref, o_ref,
                      *, L, Pg, shifts, inv_count, eps):
    m1 = m1_ref[...]                       # (1, L + 2*Pg)  {0.,1.} validity mask
    m2 = m1[:, Pg:Pg + L]                  # (1, L)

    def conv_bn_relu(h, dom, w_ref, b_ref, g_ref, be_ref, mask):
        acc = jnp.zeros((8, dom), jnp.float32)
        for t, s in enumerate(shifts):                 # in-kernel im2col taps
            tap = h[:, Pg + s:Pg + s + dom].astype(jnp.bfloat16)
            acc = acc + jnp.dot(w_ref[t].astype(jnp.bfloat16), tap,
                                preferred_element_type=jnp.float32)
        acc = acc + b_ref[...]
        # fused BatchNorm (training-mode batch stats over valid pixels) + ReLU
        mean = jnp.sum(acc * mask, axis=1, keepdims=True) * inv_count
        diff = acc - mean
        var = jnp.sum(diff * diff * mask, axis=1, keepdims=True) * inv_count
        scale = g_ref[...] * lax.rsqrt(var + eps)
        shift = be_ref[...] - mean * scale
        return jnp.maximum(acc * scale + shift, 0.0) * mask

    h0 = h0_ref[...]                                               # (8, L + 4*Pg)
    h1 = conv_bn_relu(h0, L + 2 * Pg, w1_ref, b1_ref, g1_ref, be1_ref, m1)
    h2 = conv_bn_relu(h1, L, w2_ref, b2_ref, g2_ref, be2_ref, m2)
    o_ref[...] = h2


def _pack_conv_w(w):
    """(Co, Ci, 3, 3) -> (9, 8, 8) tap-major, channel dims zero-padded to 8."""
    Co, Ci = w.shape[0], w.shape[1]
    wk = jnp.transpose(w, (2, 3, 0, 1)).reshape(9, Co, Ci)
    return jnp.pad(wk, ((0, 0), (0, 8 - Co), (0, 8 - Ci)))


def _pack_vec(v):
    """(C,) -> (8, 1), zero-padded (dead channels stay exactly zero)."""
    return jnp.pad(v.reshape(-1, 1), ((0, 8 - v.shape[0]), (0, 0)))


def conv_block(con, w1, b1, g1, be1, w2, b2, g2, be2):
    """con: (Ci, N, H, W) channels-first; returns (N, Co, H, W)."""
    Ci, N, H, W = con.shape
    Co = w1.shape[0]
    assert Ci <= 8 and Co <= 8
    Hp, Wp = H + 2, W + 2
    L = N * Hp * Wp
    Pg = Wp + 1                        # lane guard >= max |tap shift|
    shifts = tuple((dy - 1) * Wp + (dx - 1) for dy in range(3) for dx in range(3))

    # channels -> 8 sublanes, spatial 'same' zero-pad, flatten spatial to lanes,
    # then 2*Pg lane guards so stage-1 can be computed on an extended domain.
    conp = jnp.pad(con, ((0, 8 - Ci), (0, 0), (1, 1), (1, 1))).reshape(8, L)
    h0 = jnp.pad(conp, ((0, 0), (2 * Pg, 2 * Pg)))                 # (8, L + 4*Pg)

    # validity mask over the stage-1 domain (static -> built with numpy)
    j = np.arange(L + 2 * Pg) - Pg
    r = (j // Wp) % Hp
    c = j % Wp
    m1 = ((j >= 0) & (j < L) & (r >= 1) & (r <= H) & (c >= 1) & (c <= W))
    m1 = jnp.asarray(m1.astype(np.float32).reshape(1, -1))

    kernel = functools.partial(
        _convblock_kernel, L=L, Pg=Pg, shifts=shifts,
        inv_count=1.0 / float(N * H * W), eps=1e-5)

    out = pl.pallas_call(
        kernel,
        out_shape=jax.ShapeDtypeStruct((8, L), jnp.float32),
        in_specs=[_VMEM] * 10,
        out_specs=_VMEM,
    )(h0, m1,
      _pack_conv_w(w1), _pack_vec(b1), _pack_vec(g1), _pack_vec(be1),
      _pack_conv_w(w2), _pack_vec(b2), _pack_vec(g2), _pack_vec(be2))

    out = out.reshape(8, N, Hp, Wp)[:Co, :, 1:H + 1, 1:W + 1]
    return jnp.transpose(out, (1, 0, 2, 3))                        # (N, Co, H, W)


@jax.jit
def decoder_block_forward(params, x_nchw, skip_feats=None):
    del skip_feats  # unused by the reference module's forward
    con = conv_transpose_2x2(x_nchw, params["wt"], params["bt"])   # (Ci,N,2H,2W)
    return conv_block(con,
                      params["w1"], params["b1"], params["g1"], params["be1"],
                      params["w2"], params["b2"], params["g2"], params["be2"])


# -----------------------------------------------------------------------------
# Pure-JAX reference (independent math path) for a sanity check
# -----------------------------------------------------------------------------
def reference_forward(params, x_nchw, eps=1e-5):
    x = jnp.transpose(x_nchw, (0, 2, 3, 1))
    z = jnp.einsum("nhwi,iokl->nhwklo", x, params["wt"])
    N, H, W, _, _, Co = z.shape
    con = z.transpose(0, 1, 3, 2, 4, 5).reshape(N, 2 * H, 2 * W, Co) + params["bt"]

    def conv_bn_relu(h, w, b, g, be):
        w_hwio = jnp.transpose(w, (2, 3, 1, 0))
        c = lax.conv_general_dilated(
            h, w_hwio, (1, 1), "SAME",
            dimension_numbers=("NHWC", "HWIO", "NHWC")) + b
        mean = jnp.mean(c, axis=(0, 1, 2))
        var = jnp.mean((c - mean) ** 2, axis=(0, 1, 2))
        return jnp.maximum((c - mean) / jnp.sqrt(var + eps) * g + be, 0.0)

    h1 = conv_bn_relu(con, params["w1"], params["b1"], params["g1"], params["be1"])
    h2 = conv_bn_relu(h1, params["w2"], params["b2"], params["g2"], params["be2"])
    return jnp.transpose(h2, (0, 3, 1, 2))


if __name__ == "__main__":
    Ci, Co = 8, 4          # in_channels, out_channels
    N, H, W = 2, 8, 8      # input spatial 8x8 -> output 16x16

    key = jax.random.PRNGKey(0)
    ks = jax.random.split(key, 11)
    params = {
        # ConvTranspose2d weight: (in_channels, out_channels=in_channels, 2, 2)
        "wt": 0.2 * jax.random.normal(ks[0], (Ci, Ci, 2, 2), jnp.float32),
        "bt": 0.1 * jax.random.normal(ks[1], (Ci,), jnp.float32),
        # Conv2d weights: (out_channels, in_channels, 3, 3)
        "w1": 0.2 * jax.random.normal(ks[2], (Co, Ci, 3, 3), jnp.float32),
        "b1": 0.1 * jax.random.normal(ks[3], (Co,), jnp.float32),
        "g1": 1.0 + 0.1 * jax.random.normal(ks[4], (Co,), jnp.float32),
        "be1": 0.1 * jax.random.normal(ks[5], (Co,), jnp.float32),
        "w2": 0.2 * jax.random.normal(ks[6], (Co, Co, 3, 3), jnp.float32),
        "b2": 0.1 * jax.random.normal(ks[7], (Co,), jnp.float32),
        "g2": 1.0 + 0.1 * jax.random.normal(ks[8], (Co,), jnp.float32),
        "be2": 0.1 * jax.random.normal(ks[9], (Co,), jnp.float32),
    }
    x = jax.random.normal(ks[10], (N, Ci, H, W), jnp.float32)

    out = jax.block_until_ready(decoder_block_forward(params, x))
    assert out.shape == (N, Co, 2 * H, 2 * W), out.shape

    ref = jax.block_until_ready(reference_forward(params, x))
    max_err = float(jnp.max(jnp.abs(out - ref)))
    assert jnp.allclose(out, ref, atol=5e-2, rtol=5e-2), max_err

    print("KERNEL_OK")
</pallas_src>

<mosaic_0001>
module attributes {stable_mosaic.version = 11 : i64} {
  func.func @_convt_kernel(%arg0: memref<8x128xf32, #tpu.memory_space<vmem>>, %arg1: memref<32x8xf32, #tpu.memory_space<vmem>>, %arg2: memref<32x1xf32, #tpu.memory_space<vmem>>, %arg3: memref<32x128xf32, #tpu.memory_space<vmem>>) attributes {dimension_semantics = [], scalar_prefetch = 0 : i64, scratch_operands = 0 : i64, tpu.core_type = #tpu.core_type<tc>} {
    %c0 = arith.constant 0 : index
    %c0_0 = arith.constant 0 : index
    %0 = vector.load %arg1[%c0, %c0_0] : memref<32x8xf32, #tpu.memory_space<vmem>>, vector<32x8xf32>
    %c0_1 = arith.constant 0 : index
    %c0_2 = arith.constant 0 : index
    %1 = vector.load %arg0[%c0_1, %c0_2] : memref<8x128xf32, #tpu.memory_space<vmem>>, vector<8x128xf32>
    %cst = arith.constant dense<0.000000e+00> : vector<32x128xf32>
    %2 = tpu.matmul %0, %1, %cst {dimension_numbers = #tpu.dot_dimension_numbers<[1], [0], [0], [1], [0, 0, 1, 1], [], []>} : vector<32x8xf32>, vector<8x128xf32>, vector<32x128xf32> -> vector<32x128xf32>
    %c0_3 = arith.constant 0 : index
    %c0_4 = arith.constant 0 : index
    %3 = vector.load %arg2[%c0_3, %c0_4] : memref<32x1xf32, #tpu.memory_space<vmem>>, vector<32x1xf32>
    %4 = vector.broadcast %3 : vector<32x1xf32> to vector<32x128xf32>
    %5 = arith.addf %2, %4 : vector<32x128xf32>
    %c0_5 = arith.constant 0 : index
    %c0_6 = arith.constant 0 : index
    %6 = vector.load %arg3[%c0_5, %c0_6] : memref<32x128xf32, #tpu.memory_space<vmem>>, vector<32x128xf32>
    tpu.vector_store %arg3[%c0_5, %c0_6], %5 {strides = array<i32>} : memref<32x128xf32, #tpu.memory_space<vmem>>, vector<32x128xf32>,
    return
  }
}

module attributes {stable_mosaic.version = 11 : i64} {
  func.func @_convblock_kernel(%arg0: memref<8x724xf32, #tpu.memory_space<vmem>>, %arg1: memref<1x686xf32, #tpu.memory_space<vmem>>, %arg2: memref<9x8x8xf32, #tpu.memory_space<vmem>>, %arg3: memref<8x1xf32, #tpu.memory_space<vmem>>, %arg4: memref<8x1xf32, #tpu.memory_space<vmem>>, %arg5: memref<8x1xf32, #tpu.memory_space<vmem>>, %arg6: memref<9x8x8xf32, #tpu.memory_space<vmem>>, %arg7: memref<8x1xf32, #tpu.memory_space<vmem>>, %arg8: memref<8x1xf32, #tpu.memory_space<vmem>>, %arg9: memref<8x1xf32, #tpu.memory_space<vmem>>, %arg10: memref<8x648xf32, #tpu.memory_space<vmem>>) attributes {dimension_semantics = [], scalar_prefetch = 0 : i64, scratch_operands = 0 : i64, tpu.core_type = #tpu.core_type<tc>} {
    %c0 = arith.constant 0 : index
    %c0_0 = arith.constant 0 : index
    %0 = vector.load %arg1[%c0, %c0_0] : memref<1x686xf32, #tpu.memory_space<vmem>>, vector<1x686xf32>
    %1 = vector.extract_strided_slice %0 {offsets = [0, 19], sizes = [1, 648], strides = [1, 1]} : vector<1x686xf32> to vector<1x648xf32>
    %c0_1 = arith.constant 0 : index
    %c0_2 = arith.constant 0 : index
    %2 = vector.load %arg0[%c0_1, %c0_2] : memref<8x724xf32, #tpu.memory_space<vmem>>, vector<8x724xf32>
    %cst = arith.constant 0.000000e+00 : f32
    %3 = vector.broadcast %cst : f32 to vector<8x686xf32>
    %4 = vector.extract_strided_slice %2 {offsets = [0, 0], sizes = [8, 686], strides = [1, 1]} : vector<8x724xf32> to vector<8x686xf32>
    %5 = arith.truncf %4 : vector<8x686xf32> to vector<8x686xbf16>
    %c0_3 = arith.constant 0 : index
    %c0_4 = arith.constant 0 : index
    %c0_5 = arith.constant 0 : index
    %6 = vector.load %arg2[%c0_3, %c0_4, %c0_5] : memref<9x8x8xf32, #tpu.memory_space<vmem>>, vector<1x8x8xf32>
    %7 = vector.shape_cast %6 : vector<1x8x8xf32> to vector<8x8xf32>
    %8 = arith.truncf %7 : vector<8x8xf32> to vector<8x8xbf16>
    %cst_6 = arith.constant dense<0.000000e+00> : vector<8x686xf32>
    %9 = tpu.matmul %8, %5, %cst_6 {dimension_numbers = #tpu.dot_dimension_numbers<[1], [0], [0], [1], [0, 0, 1, 1], [], []>} : vector<8x8xbf16>, vector<8x686xbf16>, vector<8x686xf32> -> vector<8x686xf32>
    %10 = arith.addf %3, %9 : vector<8x686xf32>
    %11 = vector.extract_strided_slice %2 {offsets = [0, 1], sizes = [8, 686], strides = [1, 1]} : vector<8x724xf32> to vector<8x686xf32>
    %12 = arith.truncf %11 : vector<8x686xf32> to vector<8x686xbf16>
    %c1 = arith.constant 1 : index
    %c0_7 = arith.constant 0 : index
    %c0_8 = arith.constant 0 : index
    %13 = vector.load %arg2[%c1, %c0_7, %c0_8] : memref<9x8x8xf32, #tpu.memory_space<vmem>>, vector<1x8x8xf32>
    %14 = vector.shape_cast %13 : vector<1x8x8xf32> to vector<8x8xf32>
    %15 = arith.truncf %14 : vector<8x8xf32> to vector<8x8xbf16>
    %cst_9 = arith.constant dense<0.000000e+00> : vector<8x686xf32>
    %16 = tpu.matmul %15, %12, %cst_9 {dimension_numbers = #tpu.dot_dimension_numbers<[1], [0], [0], [1], [0, 0, 1, 1], [], []>} : vector<8x8xbf16>, vector<8x686xbf16>, vector<8x686xf32> -> vector<8x686xf32>
    %17 = arith.addf %10, %16 : vector<8x686xf32>
    %18 = vector.extract_strided_slice %2 {offsets = [0, 2], sizes = [8, 686], strides = [1, 1]} : vector<8x724xf32> to vector<8x686xf32>
    %19 = arith.truncf %18 : vector<8x686xf32> to vector<8x686xbf16>
    %c2 = arith.constant 2 : index
    %c0_10 = arith.constant 0 : index
    %c0_11 = arith.constant 0 : index
    %20 = vector.load %arg2[%c2, %c0_10, %c0_11] : memref<9x8x8xf32, #tpu.memory_space<vmem>>, vector<1x8x8xf32>
    %21 = vector.shape_cast %20 : vector<1x8x8xf32> to vector<8x8xf32>
    %22 = arith.truncf %21 : vector<8x8xf32> to vector<8x8xbf16>
    %cst_12 = arith.constant dense<0.000000e+00> : vector<8x686xf32>
    %23 = tpu.matmul %22, %19, %cst_12 {dimension_numbers = #tpu.dot_dimension_numbers<[1], [0], [0], [1], [0, 0, 1, 1], [], []>} : vector<8x8xbf16>, vector<8x686xbf16>, vector<8x686xf32> -> vector<8x686xf32>
    %24 = arith.addf %17, %23 : vector<8x686xf32>
    %25 = vector.extract_strided_slice %2 {offsets = [0, 18], sizes = [8, 686], strides = [1, 1]} : vector<8x724xf32> to vector<8x686xf32>
    %26 = arith.truncf %25 : vector<8x686xf32> to vector<8x686xbf16>
    %c3 = arith.constant 3 : index
    %c0_13 = arith.constant 0 : index
    %c0_14 = arith.constant 0 : index
    %27 = vector.load %arg2[%c3, %c0_13, %c0_14] : memref<9x8x8xf32, #tpu.memory_space<vmem>>, vector<1x8x8xf32>
    %28 = vector.shape_cast %27 : vector<1x8x8xf32> to vector<8x8xf32>
    %29 = arith.truncf %28 : vector<8x8xf32> to vector<8x8xbf16>
    %cst_15 = arith.constant dense<0.000000e+00> : vector<8x686xf32>
    %30 = tpu.matmul %29, %26, %cst_15 {dimension_numbers = #tpu.dot_dimension_numbers<[1], [0], [0], [1], [0, 0, 1, 1], [], []>} : vector<8x8xbf16>, vector<8x686xbf16>, vector<8x686xf32> -> vector<8x686xf32>
    %31 = arith.addf %24, %30 : vector<8x686xf32>
    %32 = vector.extract_strided_slice %2 {offsets = [0, 19], sizes = [8, 686], strides = [1, 1]} : vector<8x724xf32> to vector<8x686xf32>
    %33 = arith.truncf %32 : vector<8x686xf32> to vector<8x686xbf16>
    %c4 = arith.constant 4 : index
    %c0_16 = arith.constant 0 : index
    %c0_17 = arith.constant 0 : index
    %34 = vector.load %arg2[%c4, %c0_16, %c0_17] : memref<9x8x8xf32, #tpu.memory_space<vmem>>, vector<1x8x8xf32>
    %35 = vector.shape_cast %34 : vector<1x8x8xf32> to vector<8x8xf32>
    %36 = arith.truncf %35 : vector<8x8xf32> to vector<8x8xbf16>
    %cst_18 = arith.constant dense<0.000000e+00> : vector<8x686xf32>
    %37 = tpu.matmul %36, %33, %cst_18 {dimension_numbers = #tpu.dot_dimension_numbers<[1], [0], [0], [1], [0, 0, 1, 1], [], []>} : vector<8x8xbf16>, vector<8x686xbf16>, vector<8x686xf32> -> vector<8x686xf32>
    %38 = arith.addf %31, %37 : vector<8x686xf32>
    %39 = vector.extract_strided_slice %2 {offsets = [0, 20], sizes = [8, 686], strides = [1, 1]} : vector<8x724xf32> to vector<8x686xf32>
    %40 = arith.truncf %39 : vector<8x686xf32> to vector<8x686xbf16>
    %c5 = arith.constant 5 : index
    %c0_19 = arith.constant 0 : index
    %c0_20 = arith.constant 0 : index
    %41 = vector.load %arg2[%c5, %c0_19, %c0_20] : memref<9x8x8xf32, #tpu.memory_space<vmem>>, vector<1x8x8xf32>
    %42 = vector.shape_cast %41 : vector<1x8x8xf32> to vector<8x8xf32>
    %43 = arith.truncf %42 : vector<8x8xf32> to vector<8x8xbf16>
    %cst_21 = arith.constant dense<0.000000e+00> : vector<8x686xf32>
    %44 = tpu.matmul %43, %40, %cst_21 {dimension_numbers = #tpu.dot_dimension_numbers<[1], [0], [0], [1], [0, 0, 1, 1], [], []>} : vector<8x8xbf16>, vector<8x686xbf16>, vector<8x686xf32> -> vector<8x686xf32>
    %45 = arith.addf %38, %44 : vector<8x686xf32>
    %46 = vector.extract_strided_slice %2 {offsets = [0, 36], sizes = [8, 686], strides = [1, 1]} : vector<8x724xf32> to vector<8x686xf32>
    %47 = arith.truncf %46 : vector<8x686xf32> to vector<8x686xbf16>
    %c6 = arith.constant 6 : index
    %c0_22 = arith.constant 0 : index
    %c0_23 = arith.constant 0 : index
    %48 = vector.load %arg2[%c6, %c0_22, %c0_23] : memref<9x8x8xf32, #tpu.memory_space<vmem>>, vector<1x8x8xf32>
    %49 = vector.shape_cast %48 : vector<1x8x8xf32> to vector<8x8xf32>
    %50 = arith.truncf %49 : vector<8x8xf32> to vector<8x8xbf16>
    %cst_24 = arith.constant dense<0.000000e+00> : vector<8x686xf32>
    %51 = tpu.matmul %50, %47, %cst_24 {dimension_numbers = #tpu.dot_dimension_numbers<[1], [0], [0], [1], [0, 0, 1, 1], [], []>} : vector<8x8xbf16>, vector<8x686xbf16>, vector<8x686xf32> -> vector<8x686xf32>
    %52 = arith.addf %45, %51 : vector<8x686xf32>
    %53 = vector.extract_strided_slice %2 {offsets = [0, 37], sizes = [8, 686], strides = [1, 1]} : vector<8x724xf32> to vector<8x686xf32>
    %54 = arith.truncf %53 : vector<8x686xf32> to vector<8x686xbf16>
    %c7 = arith.constant 7 : index
    %c0_25 = arith.constant 0 : index
    %c0_26 = arith.constant 0 : index
    %55 = vector.load %arg2[%c7, %c0_25, %c0_26] : memref<9x8x8xf32, #tpu.memory_space<vmem>>, vector<1x8x8xf32>
    %56 = vector.shape_cast %55 : vector<1x8x8xf32> to vector<8x8xf32>
    %57 = arith.truncf %56 : vector<8x8xf32> to vector<8x8xbf16>
    %cst_27 = arith.constant dense<0.000000e+00> : vector<8x686xf32>
    %58 = tpu.matmul %57, %54, %cst_27 {dimension_numbers = #tpu.dot_dimension_numbers<[1], [0], [0], [1], [0, 0, 1, 1], [], []>} : vector<8x8xbf16>, vector<8x686xbf16>, vector<8x686xf32> -> vector<8x686xf32>
    %59 = arith.addf %52, %58 : vector<8x686xf32>
    %60 = vector.extract_strided_slice %2 {offsets = [0, 38], sizes = [8, 686], strides = [1, 1]} : vector<8x724xf32> to vector<8x686xf32>
    %61 = arith.truncf %60 : vector<8x686xf32> to vector<8x686xbf16>
    %c8 = arith.constant 8 : index
    %c0_28 = arith.constant 0 : index
    %c0_29 = arith.constant 0 : index
    %62 = vector.load %arg2[%c8, %c0_28, %c0_29] : memref<9x8x8xf32, #tpu.memory_space<vmem>>, vector<1x8x8xf32>
    %63 = vector.shape_cast %62 : vector<1x8x8xf32> to vector<8x8xf32>
    %64 = arith.truncf %63 : vector<8x8xf32> to vector<8x8xbf16>
    %cst_30 = arith.constant dense<0.000000e+00> : vector<8x686xf32>
    %65 = tpu.matmul %64, %61, %cst_30 {dimension_numbers = #tpu.dot_dimension_numbers<[1], [0], [0], [1], [0, 0, 1, 1], [], []>} : vector<8x8xbf16>, vector<8x686xbf16>, vector<8x686xf32> -> vector<8x686xf32>
    %66 = arith.addf %59, %65 : vector<8x686xf32>
    %c0_31 = arith.constant 0 : index
    %c0_32 = arith.constant 0 : index
    %67 = vector.load %arg3[%c0_31, %c0_32] : memref<8x1xf32, #tpu.memory_space<vmem>>, vector<8x1xf32>
    %68 = vector.broadcast %67 : vector<8x1xf32> to vector<8x686xf32>
    %69 = arith.addf %66, %68 : vector<8x686xf32>
    %70 = vector.broadcast %0 : vector<1x686xf32> to vector<8x686xf32>
    %71 = arith.mulf %69, %70 : vector<8x686xf32>
    %cst_33 = arith.constant dense<0.000000e+00> : vector<8xf32>
    %72 = vector.multi_reduction <add>, %71, %cst_33 [1] : vector<8x686xf32> to vector<8xf32>
    %73 = vector.shape_cast %72 : vector<8xf32> to vector<8x1xf32>
    %cst_34 = arith.constant 0.001953125 : f32
    %74 = vector.broadcast %cst_34 : f32 to vector<8x1xf32>
    %75 = arith.mulf %73, %74 : vector<8x1xf32>
    %76 = vector.broadcast %75 : vector<8x1xf32> to vector<8x686xf32>
    %77 = arith.subf %69, %76 : vector<8x686xf32>
    %78 = arith.mulf %77, %77 : vector<8x686xf32>
    %79 = vector.broadcast %0 : vector<1x686xf32> to vector<8x686xf32>
    %80 = arith.mulf %78, %79 : vector<8x686xf32>
    %cst_35 = arith.constant dense<0.000000e+00> : vector<8xf32>
    %81 = vector.multi_reduction <add>, %80, %cst_35 [1] : vector<8x686xf32> to vector<8xf32>
    %82 = vector.shape_cast %81 : vector<8xf32> to vector<8x1xf32>
    %cst_36 = arith.constant 0.001953125 : f32
    %83 = vector.broadcast %cst_36 : f32 to vector<8x1xf32>
    %84 = arith.mulf %82, %83 : vector<8x1xf32>
    %c0_37 = arith.constant 0 : index
    %c0_38 = arith.constant 0 : index
    %85 = vector.load %arg4[%c0_37, %c0_38] : memref<8x1xf32, #tpu.memory_space<vmem>>, vector<8x1xf32>
    %cst_39 = arith.constant 9.99999974E-6 : f32
    %86 = vector.broadcast %cst_39 : f32 to vector<8x1xf32>
    %87 = arith.addf %84, %86 : vector<8x1xf32>
    %88 = math.rsqrt %87 : vector<8x1xf32>
    %89 = arith.mulf %85, %88 : vector<8x1xf32>
    %c0_40 = arith.constant 0 : index
    %c0_41 = arith.constant 0 : index
    %90 = vector.load %arg5[%c0_40, %c0_41] : memref<8x1xf32, #tpu.memory_space<vmem>>, vector<8x1xf32>
    %91 = arith.mulf %75, %89 : vector<8x1xf32>
    %92 = arith.subf %90, %91 : vector<8x1xf32>
    %93 = vector.broadcast %89 : vector<8x1xf32> to vector<8x686xf32>
    %94 = arith.mulf %69, %93 : vector<8x686xf32>
    %95 = vector.broadcast %92 : vector<8x1xf32> to vector<8x686xf32>
    %96 = arith.addf %94, %95 : vector<8x686xf32>
    %cst_42 = arith.constant 0.000000e+00 : f32
    %97 = vector.broadcast %cst_42 : f32 to vector<8x686xf32>
    %98 = arith.maximumf %96, %97 : vector<8x686xf32>
    %99 = vector.broadcast %0 : vector<1x686xf32> to vector<8x686xf32>
    %100 = arith.mulf %98, %99 : vector<8x686xf32>
    %cst_43 = arith.constant 0.000000e+00 : f32
    %101 = vector.broadcast %cst_43 : f32 to vector<8x648xf32>
    %102 = vector.extract_strided_slice %100 {offsets = [0, 0], sizes = [8, 648], strides = [1, 1]} : vector<8x686xf32> to vector<8x648xf32>
    %103 = arith.truncf %102 : vector<8x648xf32> to vector<8x648xbf16>
    %c0_44 = arith.constant 0 : index
    %c0_45 = arith.constant 0 : index
    %c0_46 = arith.constant 0 : index
    %104 = vector.load %arg6[%c0_44, %c0_45, %c0_46] : memref<9x8x8xf32, #tpu.memory_space<vmem>>, vector<1x8x8xf32>
    %105 = vector.shape_cast %104 : vector<1x8x8xf32> to vector<8x8xf32>
    %106 = arith.truncf %105 : vector<8x8xf32> to vector<8x8xbf16>
    %cst_47 = arith.constant dense<0.000000e+00> : vector<8x648xf32>
    %107 = tpu.matmul %106, %103, %cst_47 {dimension_numbers = #tpu.dot_dimension_numbers<[1], [0], [0], [1], [0, 0, 1, 1], [], []>} : vector<8x8xbf16>, vector<8x648xbf16>, vector<8x648xf32> -> vector<8x648xf32>
    %108 = arith.addf %101, %107 : vector<8x648xf32>
    %109 = vector.extract_strided_slice %100 {offsets = [0, 1], sizes = [8, 648], strides = [1, 1]} : vector<8x686xf32> to vector<8x648xf32>
    %110 = arith.truncf %109 : vector<8x648xf32> to vector<8x648xbf16>
    %c1_48 = arith.constant 1 : index
    %c0_49 = arith.constant 0 : index
    %c0_50 = arith.constant 0 : index
    %111 = vector.load %arg6[%c1_48, %c0_49, %c0_50] : memref<9x8x8xf32, #tpu.memory_space<vmem>>, vector<1x8x8xf32>
    %112 = vector.shape_cast %111 : vector<1x8x8xf32> to vector<8x8xf32>
    %113 = arith.truncf %112 : vector<8x8xf32> to vector<8x8xbf16>
    %cst_51 = arith.constant dense<0.000000e+00> : vector<8x648xf32>
    %114 = tpu.matmul %113, %110, %cst_51 {dimension_numbers = #tpu.dot_dimension_numbers<[1], [0], [0], [1], [0, 0, 1, 1], [], []>} : vector<8x8xbf16>, vector<8x648xbf16>, vector<8x648xf32> -> vector<8x648xf32>
    %115 = arith.addf %108, %114 : vector<8x648xf32>
    %116 = vector.extract_strided_slice %100 {offsets = [0, 2], sizes = [8, 648], strides = [1, 1]} : vector<8x686xf32> to vector<8x648xf32>
    %117 = arith.truncf %116 : vector<8x648xf32> to vector<8x648xbf16>
    %c2_52 = arith.constant 2 : index
    %c0_53 = arith.constant 0 : index
    %c0_54 = arith.constant 0 : index
    %118 = vector.load %arg6[%c2_52, %c0_53, %c0_54] : memref<9x8x8xf32, #tpu.memory_space<vmem>>, vector<1x8x8xf32>
    %119 = vector.shape_cast %118 : vector<1x8x8xf32> to vector<8x8xf32>
    %120 = arith.truncf %119 : vector<8x8xf32> to vector<8x8xbf16>
    %cst_55 = arith.constant dense<0.000000e+00> : vector<8x648xf32>
    %121 = tpu.matmul %120, %117, %cst_55 {dimension_numbers = #tpu.dot_dimension_numbers<[1], [0], [0], [1], [0, 0, 1, 1], [], []>} : vector<8x8xbf16>, vector<8x648xbf16>, vector<8x648xf32> -> vector<8x648xf32>
    %122 = arith.addf %115, %121 : vector<8x648xf32>
    %123 = vector.extract_strided_slice %100 {offsets = [0, 18], sizes = [8, 648], strides = [1, 1]} : vector<8x686xf32> to vector<8x648xf32>
    %124 = arith.truncf %123 : vector<8x648xf32> to vector<8x648xbf16>
    %c3_56 = arith.constant 3 : index
    %c0_57 = arith.constant 0 : index
    %c0_58 = arith.constant 0 : index
    %125 = vector.load %arg6[%c3_56, %c0_57, %c0_58] : memref<9x8x8xf32, #tpu.memory_space<vmem>>, vector<1x8x8xf32>
    %126 = vector.shape_cast %125 : vector<1x8x8xf32> to vector<8x8xf32>
    %127 = arith.truncf %126 : vector<8x8xf32> to vector<8x8xbf16>
    %cst_59 = arith.constant dense<0.000000e+00> : vector<8x648xf32>
    %128 = tpu.matmul %127, %124, %cst_59 {dimension_numbers = #tpu.dot_dimension_numbers<[1], [0], [0], [1], [0, 0, 1, 1], [], []>} : vector<8x8xbf16>, vector<8x648xbf16>, vector<8x648xf32> -> vector<8x648xf32>
    %129 = arith.addf %122, %128 : vector<8x648xf32>
    %130 = vector.extract_strided_slice %100 {offsets = [0, 19], sizes = [8, 648], strides = [1, 1]} : vector<8x686xf32> to vector<8x648xf32>
    %131 = arith.truncf %130 : vector<8x648xf32> to vector<8x648xbf16>
    %c4_60 = arith.constant 4 : index
    %c0_61 = arith.constant 0 : index
    %c0_62 = arith.constant 0 : index
    %132 = vector.load %arg6[%c4_60, %c0_61, %c0_62] : memref<9x8x8xf32, #tpu.memory_space<vmem>>, vector<1x8x8xf32>
    %133 = vector.shape_cast %132 : vector<1x8x8xf32> to vector<8x8xf32>
    %134 = arith.truncf %133 : vector<8x8xf32> to vector<8x8xbf16>
    %cst_63 = arith.constant dense<0.000000e+00> : vector<8x648xf32>
    %135 = tpu.matmul %134, %131, %cst_63 {dimension_numbers = #tpu.dot_dimension_numbers<[1], [0], [0], [1], [0, 0, 1, 1], [], []>} : vector<8x8xbf16>, vector<8x648xbf16>, vector<8x648xf32> -> vector<8x648xf32>
    %136 = arith.addf %129, %135 : vector<8x648xf32>
    %137 = vector.extract_strided_slice %100 {offsets = [0, 20], sizes = [8, 648], strides = [1, 1]} : vector<8x686xf32> to vector<8x648xf32>
    %138 = arith.truncf %137 : vector<8x648xf32> to vector<8x648xbf16>
    %c5_64 = arith.constant 5 : index
    %c0_65 = arith.constant 0 : index
    %c0_66 = arith.constant 0 : index
    %139 = vector.load %arg6[%c5_64, %c0_65, %c0_66] : memref<9x8x8xf32, #tpu.memory_space<vmem>>, vector<1x8x8xf32>
    %140 = vector.shape_cast %139 : vector<1x8x8xf32> to vector<8x8xf32>
    %141 = arith.truncf %140 : vector<8x8xf32> to vector<8x8xbf16>
    %cst_67 = arith.constant dense<0.000000e+00> : vector<8x648xf32>
    %142 = tpu.matmul %141, %138, %cst_67 {dimension_numbers = #tpu.dot_dimension_numbers<[1], [0], [0], [1], [0, 0, 1, 1], [], []>} : vector<8x8xbf16>, vector<8x648xbf16>, vector<8x648xf32> -> vector<8x648xf32>
    %143 = arith.addf %136, %142 : vector<8x648xf32>
    %144 = vector.extract_strided_slice %100 {offsets = [0, 36], sizes = [8, 648], strides = [1, 1]} : vector<8x686xf32> to vector<8x648xf32>
    %145 = arith.truncf %144 : vector<8x648xf32> to vector<8x648xbf16>
    %c6_68 = arith.constant 6 : index
    %c0_69 = arith.constant 0 : index
    %c0_70 = arith.constant 0 : index
    %146 = vector.load %arg6[%c6_68, %c0_69, %c0_70] : memref<9x8x8xf32, #tpu.memory_space<vmem>>, vector<1x8x8xf32>
    %147 = vector.shape_cast %146 : vector<1x8x8xf32> to vector<8x8xf32>
    %148 = arith.truncf %147 : vector<8x8xf32> to vector<8x8xbf16>
    %cst_71 = arith.constant dense<0.000000e+00> : vector<8x648xf32>
    %149 = tpu.matmul %148, %145, %cst_71 {dimension_numbers = #tpu.dot_dimension_numbers<[1], [0], [0], [1], [0, 0, 1, 1], [], []>} : vector<8x8xbf16>, vector<8x648xbf16>, vector<8x648xf32> -> vector<8x648xf32>
    %150 = arith.addf %143, %149 : vector<8x648xf32>
    %151 = vector.extract_strided_slice %100 {offsets = [0, 37], sizes = [8, 648], strides = [1, 1]} : vector<8x686xf32> to vector<8x648xf32>
    %152 = arith.truncf %151 : vector<8x648xf32> to vector<8x648xbf16>
    %c7_72 = arith.constant 7 : index
    %c0_73 = arith.constant 0 : index
    %c0_74 = arith.constant 0 : index
    %153 = vector.load %arg6[%c7_72, %c0_73, %c0_74] : memref<9x8x8xf32, #tpu.memory_space<vmem>>, vector<1x8x8xf32>
    %154 = vector.shape_cast %153 : vector<1x8x8xf32> to vector<8x8xf32>
    %155 = arith.truncf %154 : vector<8x8xf32> to vector<8x8xbf16>
    %cst_75 = arith.constant dense<0.000000e+00> : vector<8x648xf32>
    %156 = tpu.matmul %155, %152, %cst_75 {dimension_numbers = #tpu.dot_dimension_numbers<[1], [0], [0], [1], [0, 0, 1, 1], [], []>} : vector<8x8xbf16>, vector<8x648xbf16>, vector<8x648xf32> -> vector<8x648xf32>
    %157 = arith.addf %150, %156 : vector<8x648xf32>
    %158 = vector.extract_strided_slice %100 {offsets = [0, 38], sizes = [8, 648], strides = [1, 1]} : vector<8x686xf32> to vector<8x648xf32>
    %159 = arith.truncf %158 : vector<8x648xf32> to vector<8x648xbf16>
    %c8_76 = arith.constant 8 : index
    %c0_77 = arith.constant 0 : index
    %c0_78 = arith.constant 0 : index
    %160 = vector.load %arg6[%c8_76, %c0_77, %c0_78] : memref<9x8x8xf32, #tpu.memory_space<vmem>>, vector<1x8x8xf32>
    %161 = vector.shape_cast %160 : vector<1x8x8xf32> to vector<8x8xf32>
    %162 = arith.truncf %161 : vector<8x8xf32> to vector<8x8xbf16>
    %cst_79 = arith.constant dense<0.000000e+00> : vector<8x648xf32>
    %163 = tpu.matmul %162, %159, %cst_79 {dimension_numbers = #tpu.dot_dimension_numbers<[1], [0], [0], [1], [0, 0, 1, 1], [], []>} : vector<8x8xbf16>, vector<8x648xbf16>, vector<8x648xf32> -> vector<8x648xf32>
    %164 = arith.addf %157, %163 : vector<8x648xf32>
    %c0_80 = arith.constant 0 : index
    %c0_81 = arith.constant 0 : index
    %165 = vector.load %arg7[%c0_80, %c0_81] : memref<8x1xf32, #tpu.memory_space<vmem>>, vector<8x1xf32>
    %166 = vector.broadcast %165 : vector<8x1xf32> to vector<8x648xf32>
    %167 = arith.addf %164, %166 : vector<8x648xf32>
    %168 = vector.broadcast %1 : vector<1x648xf32> to vector<8x648xf32>
    %169 = arith.mulf %167, %168 : vector<8x648xf32>
    %cst_82 = arith.constant dense<0.000000e+00> : vector<8xf32>
    %170 = vector.multi_reduction <add>, %169, %cst_82 [1] : vector<8x648xf32> to vector<8xf32>
    %171 = vector.shape_cast %170 : vector<8xf32> to vector<8x1xf32>
    %cst_83 = arith.constant 0.001953125 : f32
    %172 = vector.broadcast %cst_83 : f32 to vector<8x1xf32>
    %173 = arith.mulf %171, %172 : vector<8x1xf32>
    %174 = vector.broadcast %173 : vector<8x1xf32> to vector<8x648xf32>
    %175 = arith.subf %167, %174 : vector<8x648xf32>
    %176 = arith.mulf %175, %175 : vector<8x648xf32>
    %177 = vector.broadcast %1 : vector<1x648xf32> to vector<8x648xf32>
    %178 = arith.mulf %176, %177 : vector<8x648xf32>
    %cst_84 = arith.constant dense<0.000000e+00> : vector<8xf32>
    %179 = vector.multi_reduction <add>, %178, %cst_84 [1] : vector<8x648xf32> to vector<8xf32>
    %180 = vector.shape_cast %179 : vector<8xf32> to vector<8x1xf32>
    %cst_85 = arith.constant 0.001953125 : f32
    %181 = vector.broadcast %cst_85 : f32 to vector<8x1xf32>
    %182 = arith.mulf %180, %181 : vector<8x1xf32>
    %c0_86 = arith.constant 0 : index
    %c0_87 = arith.constant 0 : index
    %183 = vector.load %arg8[%c0_86, %c0_87] : memref<8x1xf32, #tpu.memory_space<vmem>>, vector<8x1xf32>
    %cst_88 = arith.constant 9.99999974E-6 : f32
    %184 = vector.broadcast %cst_88 : f32 to vector<8x1xf32>
    %185 = arith.addf %182, %184 : vector<8x1xf32>
    %186 = math.rsqrt %185 : vector<8x1xf32>
    %187 = arith.mulf %183, %186 : vector<8x1xf32>
    %c0_89 = arith.constant 0 : index
    %c0_90 = arith.constant 0 : index
    %188 = vector.load %arg9[%c0_89, %c0_90] : memref<8x1xf32, #tpu.memory_space<vmem>>, vector<8x1xf32>
    %189 = arith.mulf %173, %187 : vector<8x1xf32>
    %190 = arith.subf %188, %189 : vector<8x1xf32>
    %191 = vector.broadcast %187 : vector<8x1xf32> to vector<8x648xf32>
    %192 = arith.mulf %167, %191 : vector<8x648xf32>
    %193 = vector.broadcast %190 : vector<8x1xf32> to vector<8x648xf32>
    %194 = arith.addf %192, %193 : vector<8x648xf32>
    %cst_91 = arith.constant 0.000000e+00 : f32
    %195 = vector.broadcast %cst_91 : f32 to vector<8x648xf32>
    %196 = arith.maximumf %194, %195 : vector<8x648xf32>
    %197 = vector.broadcast %1 : vector<1x648xf32> to vector<8x648xf32>
    %198 = arith.mulf %196, %197 : vector<8x648xf32>
    %c0_92 = arith.constant 0 : index
    %c0_93 = arith.constant 0 : index
    %199 = vector.load %arg10[%c0_92, %c0_93] : memref<8x648xf32, #tpu.memory_space<vmem>>, vector<8x648xf32>
    tpu.vector_store %arg10[%c0_92, %c0_93], %198 {strides = array<i32>} : memref<8x648xf32, #tpu.memory_space<vmem>>, vector<8x648xf32>,
    return
  }
}

</mosaic_0001>

<llo_original>
// kernel: decoder_block_forward.2
$region0: #{decoder_block_forward.2}
  #allocation0 [shape = 'u32[]', space=smem, size = 0x4, offset = 0x4, fixed_abs, tag = 'smem constant byte address 0x4 - core index']
  #allocation1 [shape = 'u32[72,128]{1,0:T(1,128)}', space=vmem, size = 0x9000, scoped, tag = 'internal scratch']
  %s0 = inlined_call_operand.vmem [shape: f32[8,128], index: 0, kind: input, shape index: {}]
  %s1 = inlined_call_operand.vmem [shape: f32[32,8], index: 1, kind: input, shape index: {}]
  %s2 = inlined_call_operand.vmem [shape: f32[32,1], index: 2, kind: input, shape index: {}]
  %s3 = inlined_call_operand.vmem [shape: f32[32,128], index: 3, kind: output, shape index: {}]
  %s4 = sld [smem:[#allocation0]]
  $region22: #{decoder_block_forward.2} parent=0
    _
  %s6 = ssub.s32 1, %s4
  %s7 = scalar_select 0, %s6, %s4
  // Predicated region
  $region2: #{decoder_block_forward.2} parent=0 // pred_check
    _
  $region3: #{decoder_block_forward.2} parent=0 // pred_check_branch
    %9 = sbr.rel (0) target = $region5
  $region4: #{decoder_block_forward.2} parent=0 // pred_region
    _
  $region5: #{decoder_block_forward.2} parent=0 // pred_fallthru
    _
  // Predicated region
  $region6: #{decoder_block_forward.2} parent=0 // pred_check
    _
  $region7: #{decoder_block_forward.2} parent=0 // pred_check_branch
    %11 = sbr.rel (0) target = $region9
  $region8: #{decoder_block_forward.2} parent=0 // pred_region
    _
  $region9: #{decoder_block_forward.2} parent=0 // pred_fallthru
    _
  // Predicated region
  $region10: #{decoder_block_forward.2} parent=0 // pred_check
    _
  $region11: #{decoder_block_forward.2} parent=0 // pred_check_branch
    %13 = sbr.rel (0) target = $region13
  $region12: #{decoder_block_forward.2} parent=0 // pred_region
    _
  $region13: #{decoder_block_forward.2} parent=0 // pred_fallthru
    _
  %v14 = vld [vmem:[%s1] sm:$0xff]
  %v15 = vld [vmem:[%s1 + $0x8] sm:$0xff]
  %v16 = vld [vmem:[%s1 + $0x10] sm:$0xff]
  %v17 = vld [vmem:[%s1 + $0x18] sm:$0xff]
  %v18 = vld [vmem:[%s0] sm:$0xff]
  %v19 = vld [vmem:[%s2] sm:$0xff]
  %v20 = vld [vmem:[%s2 + $0x8] sm:$0xff]
  %v21 = vld [vmem:[%s2 + $0x10] sm:$0xff]
  %v22 = vld [vmem:[%s2 + $0x18] sm:$0xff]
  %24 = vset.pattern.permute.xlu0 0
  %25 = vperm.xlu0 %24, %v19
  %v26 = vpop.permute.xlu0 %25
  %29 = vset.pattern.permute.xlu0 0
  %30 = vperm.xlu0 %29, %v20
  %v31 = vpop.permute.xlu0 %30
  %34 = vset.pattern.permute.xlu0 0
  %35 = vperm.xlu0 %34, %v21
  %v36 = vpop.permute.xlu0 %35
  %39 = vset.pattern.permute.xlu0 0
  %40 = vperm.xlu0 %39, %v22
  %v41 = vpop.permute.xlu0 %40
  %vm43 = vcmask 64512
  %v45 = vsel %vm43, %v14, 0
  %v48 = vsel %vm43, %v15, 0
  %v51 = vsel %vm43, %v16, 0
  %v54 = vsel %vm43, %v17, 0
  %56 = vmatpush.msra.mxu0 0.0
  %57 = vmatpush.msra.mxu0 0.0
  %58 = vmatpush.msra.mxu0 0.0
  %59 = vmatpush.msra.mxu0 0.0
  %60 = vmatpush.msra.mxu0 0.0
  %61 = vmatpush.msra.mxu0 0.0
  %62 = vmatpush.msra.mxu0 0.0
  %63 = vmatpush.msra.mxu0 0.0
  %64 = vmatpush.msra.mxu0 0.0
  %65 = vmatpush.msra.mxu0 0.0
  %66 = vmatpush.msra.mxu0 0.0
  %67 = vmatpush.msra.mxu0 0.0
  %68 = vmatpush.msra.mxu0 0.0
  %69 = vmatpush.msra.mxu0 0.0
  %70 = vmatpush.msra.mxu0 0.0
  %71 = vmatpush.msra.mxu0 %v18
  %72 = vmatmul.f32.gmra.mxu0 %v45
  %v73 = vpop.f32.mrf.mxu0
  %v74 = vadd.f32 %v26, %v73
  %75 = vmatmul.f32.gmra.mxu0 %v48
  %v76 = vpop.f32.mrf.mxu0
  %v77 = vadd.f32 %v31, %v76
  %78 = vmatmul.f32.gmra.mxu0 %v51
  %v79 = vpop.f32.mrf.mxu0
  %v80 = vadd.f32 %v36, %v79
  %81 = vmatmul.f32.gmra.mxu0 %v54
  %v82 = vpop.f32.mrf.mxu0
  %v83 = vadd.f32 %v41, %v82
  %84 = vdwg.mxu0
  %85 = vst [vmem:[%s3] sm:$0xff] %v74
  %86 = vst [vmem:[%s3 + $0x8] sm:$0xff] %v77
  %87 = vst [vmem:[%s3 + $0x10] sm:$0xff] %v80
  %88 = vst [vmem:[%s3 + $0x18] sm:$0xff] %v83
  // Predicated region
  $region14: #{decoder_block_forward.2} parent=0 // pred_check
    _
  $region15: #{decoder_block_forward.2} parent=0 // pred_check_branch
    %90 = sbr.rel (0) target = $region17
  $region16: #{decoder_block_forward.2} parent=0 // pred_region
    _
  $region17: #{decoder_block_forward.2} parent=0 // pred_fallthru
    _
  // Predicated region
  $region18: #{decoder_block_forward.2} parent=0 // pred_check
    _
  $region19: #{decoder_block_forward.2} parent=0 // pred_check_branch
    %92 = sbr.rel (0) target = $region21
  $region20: #{decoder_block_forward.2} parent=0 // pred_region
    _
  $region21: #{decoder_block_forward.2} parent=0 // pred_fallthru
    _

// kernel: decoder_block_forward.3
$region0: #{decoder_block_forward.3}
  #allocation0 [shape = 'u32[]', space=smem, size = 0x4, offset = 0x4, fixed_abs, tag = 'smem constant byte address 0x4 - core index']
  #allocation1 [shape = 'u32[72,128]{1,0:T(1,128)}', space=vmem, size = 0x9000, scoped, tag = 'internal scratch']
  %s0 = inlined_call_operand.vmem [shape: f32[8,724], index: 0, kind: input, shape index: {}]
  %s1 = inlined_call_operand.vmem [shape: f32[1,686], index: 1, kind: input, shape index: {}]
  %s2 = inlined_call_operand.vmem [shape: f32[9,8,8], index: 2, kind: input, shape index: {}]
  %s3 = inlined_call_operand.vmem [shape: f32[8,1], index: 3, kind: input, shape index: {}]
  %s4 = inlined_call_operand.vmem [shape: f32[8,1], index: 4, kind: input, shape index: {}]
  %s5 = inlined_call_operand.vmem [shape: f32[8,1], index: 5, kind: input, shape index: {}]
  %s6 = inlined_call_operand.vmem [shape: f32[9,8,8], index: 6, kind: input, shape index: {}]
  %s7 = inlined_call_operand.vmem [shape: f32[8,1], index: 7, kind: input, shape index: {}]
  %s8 = inlined_call_operand.vmem [shape: f32[8,1], index: 8, kind: input, shape index: {}]
  %s9 = inlined_call_operand.vmem [shape: f32[8,1], index: 9, kind: input, shape index: {}]
  %s10 = inlined_call_operand.vmem [shape: f32[8,648], index: 10, kind: output, shape index: {}]
  %s11 = sld [smem:[#allocation0]]
  $region50: #{decoder_block_forward.3} parent=0
    _
  %s13 = ssub.s32 1, %s11
  %s14 = scalar_select 0, %s13, %s11
  // Predicated region
  $region2: #{decoder_block_forward.3} parent=0 // pred_check
    _
  $region3: #{decoder_block_forward.3} parent=0 // pred_check_branch
    %16 = sbr.rel (0) target = $region5
  $region4: #{decoder_block_forward.3} parent=0 // pred_region
    _
  $region5: #{decoder_block_forward.3} parent=0 // pred_fallthru
    _
  // Predicated region
  $region6: #{decoder_block_forward.3} parent=0 // pred_check
    _
  $region7: #{decoder_block_forward.3} parent=0 // pred_check_branch
    %18 = sbr.rel (0) target = $region9
  $region8: #{decoder_block_forward.3} parent=0 // pred_region
    _
  $region9: #{decoder_block_forward.3} parent=0 // pred_fallthru
    _
  // Predicated region
  $region10: #{decoder_block_forward.3} parent=0 // pred_check
    _
  $region11: #{decoder_block_forward.3} parent=0 // pred_check_branch
    %20 = sbr.rel (0) target = $region13
  $region12: #{decoder_block_forward.3} parent=0 // pred_region
    _
  $region13: #{decoder_block_forward.3} parent=0 // pred_fallthru
    _
  // Predicated region
  $region14: #{decoder_block_forward.3} parent=0 // pred_check
    _
  $region15: #{decoder_block_forward.3} parent=0 // pred_check_branch
    %22 = sbr.rel (0) target = $region17
  $region16: #{decoder_block_forward.3} parent=0 // pred_region
    _
  $region17: #{decoder_block_forward.3} parent=0 // pred_fallthru
    _
  // Predicated region
  $region18: #{decoder_block_forward.3} parent=0 // pred_check
    _
  $region19: #{decoder_block_forward.3} parent=0 // pred_check_branch
    %24 = sbr.rel (0) target = $region21
  $region20: #{decoder_block_forward.3} parent=0 // pred_region
    _
  $region21: #{decoder_block_forward.3} parent=0 // pred_fallthru
    _
  // Predicated region
  $region22: #{decoder_block_forward.3} parent=0 // pred_check
    _
  $region23: #{decoder_block_forward.3} parent=0 // pred_check_branch
    %26 = sbr.rel (0) target = $region25
  $region24: #{decoder_block_forward.3} parent=0 // pred_region
    _
  $region25: #{decoder_block_forward.3} parent=0 // pred_fallthru
    _
  // Predicated region
  $region26: #{decoder_block_forward.3} parent=0 // pred_check
    _
  $region27: #{decoder_block_forward.3} parent=0 // pred_check_branch
    %28 = sbr.rel (0) target = $region29
  $region28: #{decoder_block_forward.3} parent=0 // pred_region
    _
  $region29: #{decoder_block_forward.3} parent=0 // pred_fallthru
    _
  // Predicated region
  $region30: #{decoder_block_forward.3} parent=0 // pred_check
    _
  $region31: #{decoder_block_forward.3} parent=0 // pred_check_branch
    %30 = sbr.rel (0) target = $region33
  $region32: #{decoder_block_forward.3} parent=0 // pred_region
    _
  $region33: #{decoder_block_forward.3} parent=0 // pred_fallthru
    _
  // Predicated region
  $region34: #{decoder_block_forward.3} parent=0 // pred_check
    _
  $region35: #{decoder_block_forward.3} parent=0 // pred_check_branch
    %32 = sbr.rel (0) target = $region37
  $region36: #{decoder_block_forward.3} parent=0 // pred_region
    _
  $region37: #{decoder_block_forward.3} parent=0 // pred_fallthru
    _
  // Predicated region
  $region38: #{decoder_block_forward.3} parent=0 // pred_check
    _
  $region39: #{decoder_block_forward.3} parent=0 // pred_check_branch
    %34 = sbr.rel (0) target = $region41
  $region40: #{decoder_block_forward.3} parent=0 // pred_region
    _
  $region41: #{decoder_block_forward.3} parent=0 // pred_fallthru
    _
  %v36 = vld [vmem:[%s1] sm:$0x3f]
  %v37 = vld [vmem:[%s0] sm:$0xff]
  %v38 = vld [vmem:[%s0 + $0x8] sm:$0xff]
  %v39 = vld [vmem:[%s0 + $0x10] sm:$0xff]
  %v40 = vld [vmem:[%s0 + $0x18] sm:$0xff]
  %v41 = vld [vmem:[%s0 + $0x20] sm:$0xff]
  %v42 = vld [vmem:[%s0 + $0x28] sm:$0xff]
  %v43 = vpack.c.bf16 %v37, %v37
  %v44 = vpack.c.bf16 %v38, %v38
  %v45 = vpack.c.bf16 %v39, %v39
  %v46 = vpack.c.bf16 %v40, %v40
  %v47 = vpack.c.bf16 %v41, %v41
  %v48 = vpack.c.bf16 %v42, %v42
  %v49 = vld [vmem:[%s2] sm:$0xff]
  %v50 = vpack.c.bf16 %v49, %v49
  %s51 = scalar_lea.vmem %s2, 8
  %v52 = vld [vmem:[%s51] sm:$0xff]
  %v53 = vpack.c.bf16 %v52, %v52
  %60 = vrot.lane.b32.xlu0 %v43, 127
  %v61 = vpop.permute.xlu0 %60
  %62 = vrot.lane.b32.xlu0 %v44, 127
  %v63 = vpop.permute.xlu0 %62
  %64 = vrot.lane.b32.xlu0 %v45, 127
  %v65 = vpop.permute.xlu0 %64
  %66 = vrot.lane.b32.xlu0 %v46, 127
  %v67 = vpop.permute.xlu0 %66
  %68 = vrot.lane.b32.xlu0 %v47, 127
  %v69 = vpop.permute.xlu0 %68
  %70 = vrot.lane.b32.xlu0 %v48, 127
  %v71 = vpop.permute.xlu0 %70
  %vm72 = vcmask 1039360
  %v73 = vsel %vm72, %v61, %v63
  %v74 = vsel %vm72, %v63, %v65
  %v75 = vsel %vm72, %v65, %v67
  %v76 = vsel %vm72, %v67, %v69
  %v77 = vsel %vm72, %v69, %v71
  %vm78 = vcmask 64512
  %v80 = vsel %vm78, %v53, 0
  %vm82 = vcmask 1043456
  %v84 = vsel %vm82, %v73, 0
  %v87 = vsel %vm82, %v74, 0
  %v90 = vsel %vm82, %v75, 0
  %v93 = vsel %vm82, %v76, 0
  %v96 = vsel %vm82, %v77, 0
  %v99 = vsel %vm82, %v71, 0
  %101 = vmatpush.bf16.msra.mxu0 0
  %102 = vmatpush.bf16.msra.mxu0 0
  %103 = vmatpush.bf16.msra.mxu0 0
  %104 = vmatpush.bf16.msra.mxu0 0
  %105 = vmatpush.bf16.msra.mxu0 0
  %106 = vmatpush.bf16.msra.mxu0 0
  %107 = vmatpush.bf16.msra.mxu0 0
  %108 = vmatpush.bf16.msra.mxu0 %v84
  %109 = vmatmul.bf16.gmra.mxu0 %v80
  %v110 = vpop.f32.mrf.mxu0
  %v111 = vadd.f32 0.0, %v110
  %v112 = vpop.f32.mrf.mxu0
  %113 = vdwg.mxu0
  %114 = vmatpush.bf16.msra.mxu0 0
  %115 = vmatpush.bf16.msra.mxu0 0
  %116 = vmatpush.bf16.msra.mxu0 0
  %117 = vmatpush.bf16.msra.mxu0 0
  %118 = vmatpush.bf16.msra.mxu0 0
  %119 = vmatpush.bf16.msra.mxu0 0
  %120 = vmatpush.bf16.msra.mxu0 0
  %121 = vmatpush.bf16.msra.mxu0 %v87
  %122 = vmatmul.bf16.gmra.mxu0 %v80
  %v123 = vpop.f32.mrf.mxu0
  %v124 = vadd.f32 0.0, %v123
  %v125 = vpop.f32.mrf.mxu0
  %126 = vdwg.mxu0
  %127 = vmatpush.bf16.msra.mxu0 0
  %128 = vmatpush.bf16.msra.mxu0 0
  %129 = vmatpush.bf16.msra.mxu0 0
  %130 = vmatpush.bf16.msra.mxu0 0
  %131 = vmatpush.bf16.msra.mxu0 0
  %132 = vmatpush.bf16.msra.mxu0 0
  %133 = vmatpush.bf16.msra.mxu0 0
  %134 = vmatpush.bf16.msra.mxu0 %v90
  %135 = vmatmul.bf16.gmra.mxu0 %v80
  %v136 = vpop.f32.mrf.mxu0
  %v137 = vadd.f32 0.0, %v136
  %v138 = vpop.f32.mrf.mxu0
  %139 = vdwg.mxu0
  %140 = vmatpush.bf16.msra.mxu0 0
  %141 = vmatpush.bf16.msra.mxu0 0
  %142 = vmatpush.bf16.msra.mxu0 0
  %143 = vmatpush.bf16.msra.mxu0 0
  %144 = vmatpush.bf16.msra.mxu0 0
  %145 = vmatpush.bf16.msra.mxu0 0
  %146 = vmatpush.bf16.msra.mxu0 0
  %147 = vmatpush.bf16.msra.mxu0 %v93
  %148 = vmatmul.bf16.gmra.mxu0 %v80
  %v149 = vpop.f32.mrf.mxu0
  %v150 = vadd.f32 0.0, %v149
  %v151 = vpop.f32.mrf.mxu0
  %152 = vdwg.mxu0
  %153 = vmatpush.bf16.msra.mxu0 0
  %154 = vmatpush.bf16.msra.mxu0 0
  %155 = vmatpush.bf16.msra.mxu0 0
  %156 = vmatpush.bf16.msra.mxu0 0
  %157 = vmatpush.bf16.msra.mxu0 0
  %158 = vmatpush.bf16.msra.mxu0 0
  %159 = vmatpush.bf16.msra.mxu0 0
  %160 = vmatpush.bf16.msra.mxu0 %v96
  %161 = vmatmul.bf16.gmra.mxu0 %v80
  %v162 = vpop.f32.mrf.mxu0
  %v163 = vadd.f32 0.0, %v162
  %v164 = vpop.f32.mrf.mxu0
  %165 = vdwg.mxu0
  %166 = vmatpush.bf16.msra.mxu0 0
  %167 = vmatpush.bf16.msra.mxu0 0
  %168 = vmatpush.bf16.msra.mxu0 0
  %169 = vmatpush.bf16.msra.mxu0 0
  %170 = vmatpush.bf16.msra.mxu0 0
  %171 = vmatpush.bf16.msra.mxu0 0
  %172 = vmatpush.bf16.msra.mxu0 0
  %173 = vmatpush.bf16.msra.mxu0 %v99
  %174 = vmatmul.bf16.gmra.mxu0 %v80
  %v175 = vpop.f32.mrf.mxu0
  %v176 = vadd.f32 0.0, %v175
  %v177 = vpop.f32.mrf.mxu0
  %178 = vdwg.mxu0
  %v180 = vsel %vm78, %v50, 0
  %v183 = vsel %vm82, %v43, 0
  %v186 = vsel %vm82, %v44, 0
  %v189 = vsel %vm82, %v45, 0
  %v192 = vsel %vm82, %v46, 0
  %v195 = vsel %vm82, %v47, 0
  %v198 = vsel %vm82, %v48, 0
  %200 = vmatpush.bf16.msra.mxu0 0
  %201 = vmatpush.bf16.msra.mxu0 0
  %202 = vmatpush.bf16.msra.mxu0 0
  %203 = vmatpush.bf16.msra.mxu0 0
  %204 = vmatpush.bf16.msra.mxu0 0
  %205 = vmatpush.bf16.msra.mxu0 0
  %206 = vmatpush.bf16.msra.mxu0 0
  %207 = vmatpush.bf16.msra.mxu0 %v183
  %208 = vmatmul.bf16.gmra.mxu0 %v180
  %v209 = vpop.f32.mrf.mxu0
  %v210 = vadd.f32 %v111, %v209
  %v211 = vpop.f32.mrf.mxu0
  %212 = vdwg.mxu0
  %213 = vmatpush.bf16.msra.mxu0 0
  %214 = vmatpush.bf16.msra.mxu0 0
  %215 = vmatpush.bf16.msra.mxu0 0
  %216 = vmatpush.bf16.msra.mxu0 0
  %217 = vmatpush.bf16.msra.mxu0 0
  %218 = vmatpush.bf16.msra.mxu0 0
  %219 = vmatpush.bf16.msra.mxu0 0
  %220 = vmatpush.bf16.msra.mxu0 %v186
  %221 = vmatmul.bf16.gmra.mxu0 %v180
  %v222 = vpop.f32.mrf.mxu0
  %v223 = vadd.f32 %v124, %v222
  %v224 = vpop.f32.mrf.mxu0
  %225 = vdwg.mxu0
  %226 = vmatpush.bf16.msra.mxu0 0
  %227 = vmatpush.bf16.msra.mxu0 0
  %228 = vmatpush.bf16.msra.mxu0 0
  %229 = vmatpush.bf16.msra.mxu0 0
  %230 = vmatpush.bf16.msra.mxu0 0
  %231 = vmatpush.bf16.msra.mxu0 0
  %232 = vmatpush.bf16.msra.mxu0 0
  %233 = vmatpush.bf16.msra.mxu0 %v189
  %234 = vmatmul.bf16.gmra.mxu0 %v180
  %v235 = vpop.f32.mrf.mxu0
  %v236 = vadd.f32 %v137, %v235
  %v237 = vpop.f32.mrf.mxu0
  %238 = vdwg.mxu0
  %239 = vmatpush.bf16.msra.mxu0 0
  %240 = vmatpush.bf16.msra.mxu0 0
  %241 = vmatpush.bf16.msra.mxu0 0
  %242 = vmatpush.bf16.msra.mxu0 0
  %243 = vmatpush.bf16.msra.mxu0 0
  %244 = vmatpush.bf16.msra.mxu0 0
  %245 = vmatpush.bf16.msra.mxu0 0
  %246 = vmatpush.bf16.msra.mxu0 %v192
  %247 = vmatmul.bf16.gmra.mxu0 %v180
  %v248 = vpop.f32.mrf.mxu0
  %v249 = vadd.f32 %v150, %v248
  %v250 = vpop.f32.mrf.mxu0
  %251 = vdwg.mxu0
  %252 = vmatpush.bf16.msra.mxu0 0
  %253 = vmatpush.bf16.msra.mxu0 0
  %254 = vmatpush.bf16.msra.mxu0 0
  %255 = vmatpush.bf16.msra.mxu0 0
  %256 = vmatpush.bf16.msra.mxu0 0
  %257 = vmatpush.bf16.msra.mxu0 0
  %258 = vmatpush.bf16.msra.mxu0 0
  %259 = vmatpush.bf16.msra.mxu0 %v195
  %260 = vmatmul.bf16.gmra.mxu0 %v180
  %v261 = vpop.f32.mrf.mxu0
  %v262 = vadd.f32 %v163, %v261
  %v263 = vpop.f32.mrf.mxu0
  %264 = vdwg.mxu0
  %265 = vmatpush.bf16.msra.mxu0 0
  %266 = vmatpush.bf16.msra.mxu0 0
  %267 = vmatpush.bf16.msra.mxu0 0
  %268 = vmatpush.bf16.msra.mxu0 0
  %269 = vmatpush.bf16.msra.mxu0 0
  %270 = vmatpush.bf16.msra.mxu0 0
  %271 = vmatpush.bf16.msra.mxu0 0
  %272 = vmatpush.bf16.msra.mxu0 %v198
  %273 = vmatmul.bf16.gmra.mxu0 %v180
  %v274 = vpop.f32.mrf.mxu0
  %v275 = vadd.f32 %v176, %v274
  %v276 = vpop.f32.mrf.mxu0
  %277 = vdwg.mxu0
  %s278 = scalar_lea.vmem %s2, 16
  %v279 = vld [vmem:[%s278] sm:$0xff]
  %v280 = vpack.c.bf16 %v279, %v279
  %281 = vrot.lane.b32.xlu0 %v43, 126
  %v282 = vpop.permute.xlu0 %281
  %283 = vrot.lane.b32.xlu0 %v44, 126
  %v284 = vpop.permute.xlu0 %283
  %285 = vrot.lane.b32.xlu0 %v45, 126
  %v286 = vpop.permute.xlu0 %285
  %287 = vrot.lane.b32.xlu0 %v46, 126
  %v288 = vpop.permute.xlu0 %287
  %289 = vrot.lane.b32.xlu0 %v47, 126
  %v290 = vpop.permute.xlu0 %289
  %291 = vrot.lane.b32.xlu0 %v48, 126
  %v292 = vpop.permute.xlu0 %291
  %vm293 = vcmask 1031168
  %v294 = vsel %vm293, %v282, %v284
  %v295 = vsel %vm293, %v284, %v286
  %v296 = vsel %vm293, %v286, %v288
  %v297 = vsel %vm293, %v288, %v290
  %v298 = vsel %vm293, %v290, %v292
  %v300 = vsel %vm78, %v280, 0
  %v303 = vsel %vm82, %v294, 0
  %v306 = vsel %vm82, %v295, 0
  %v309 = vsel %vm82, %v296, 0
  %v312 = vsel %vm82, %v297, 0
  %v315 = vsel %vm82, %v298, 0
  %v318 = vsel %vm82, %v292, 0
  %320 = vmatpush.bf16.msra.mxu0 0
  %321 = vmatpush.bf16.msra.mxu0 0
  %322 = vmatpush.bf16.msra.mxu0 0
  %323 = vmatpush.bf16.msra.mxu0 0
  %324 = vmatpush.bf16.msra.mxu0 0
  %325 = vmatpush.bf16.msra.mxu0 0
  %326 = vmatpush.bf16.msra.mxu0 0
  %327 = vmatpush.bf16.msra.mxu0 %v303
  %328 = vmatmul.bf16.gmra.mxu0 %v300
  %v329 = vpop.f32.mrf.mxu0
  %v330 = vadd.f32 0.0, %v329
  %v331 = vpop.f32.mrf.mxu0
  %332 = vdwg.mxu0
  %333 = vmatpush.bf16.msra.mxu0 0
  %334 = vmatpush.bf16.msra.mxu0 0
  %335 = vmatpush.bf16.msra.mxu0 0
  %336 = vmatpush.bf16.msra.mxu0 0
  %337 = vmatpush.bf16.msra.mxu0 0
  %338 = vmatpush.bf16.msra.mxu0 0
  %339 = vmatpush.bf16.msra.mxu0 0
  %340 = vmatpush.bf16.msra.mxu0 %v306
  %341 = vmatmul.bf16.gmra.mxu0 %v300
  %v342 = vpop.f32.mrf.mxu0
  %v343 = vadd.f32 0.0, %v342
  %v344 = vpop.f32.mrf.mxu0
  %345 = vdwg.mxu0
  %346 = vmatpush.bf16.msra.mxu0 0
  %347 = vmatpush.bf16.msra.mxu0 0
  %348 = vmatpush.bf16.msra.mxu0 0
  %349 = vmatpush.bf16.msra.mxu0 0
  %350 = vmatpush.bf16.msra.mxu0 0
  %351 = vmatpush.bf16.msra.mxu0 0
  %352 = vmatpush.bf16.msra.mxu0 0
  %353 = vmatpush.bf16.msra.mxu0 %v309
  %354 = vmatmul.bf16.gmra.mxu0 %v300
  %v355 = vpop.f32.mrf.mxu0
  %v356 = vadd.f32 0.0, %v355
  %v357 = vpop.f32.mrf.mxu0
  %358 = vdwg.mxu0
  %359 = vmatpush.bf16.msra.mxu0 0
  %360 = vmatpush.bf16.msra.mxu0 0
  %361 = vmatpush.bf16.msra.mxu0 0
  %362 = vmatpush.bf16.msra.mxu0 0
  %363 = vmatpush.bf16.msra.mxu0 0
  %364 = vmatpush.bf16.msra.mxu0 0
  %365 = vmatpush.bf16.msra.mxu0 0
  %366 = vmatpush.bf16.msra.mxu0 %v312
  %367 = vmatmul.bf16.gmra.mxu0 %v300
  %v368 = vpop.f32.mrf.mxu0
  %v369 = vadd.f32 0.0, %v368
  %v370 = vpop.f32.mrf.mxu0
  %371 = vdwg.mxu0
  %372 = vmatpush.bf16.msra.mxu0 0
  %373 = vmatpush.bf16.msra.mxu0 0
  %374 = vmatpush.bf16.msra.mxu0 0
  %375 = vmatpush.bf16.msra.mxu0 0
  %376 = vmatpush.bf16.msra.mxu0 0
  %377 = vmatpush.bf16.msra.mxu0 0
  %378 = vmatpush.bf16.msra.mxu0 0
  %379 = vmatpush.bf16.msra.mxu0 %v315
  %380 = vmatmul.bf16.gmra.mxu0 %v300
  %v381 = vpop.f32.mrf.mxu0
  %v382 = vadd.f32 0.0, %v381
  %v383 = vpop.f32.mrf.mxu0
  %384 = vdwg.mxu0
  %385 = vmatpush.bf16.msra.mxu0 0
  %386 = vmatpush.bf16.msra.mxu0 0
  %387 = vmatpush.bf16.msra.mxu0 0
  %388 = vmatpush.bf16.msra.mxu0 0
  %389 = vmatpush.bf16.msra.mxu0 0
  %390 = vmatpush.bf16.msra.mxu0 0
  %391 = vmatpush.bf16.msra.mxu0 0
  %392 = vmatpush.bf16.msra.mxu0 %v318
  %393 = vmatmul.bf16.gmra.mxu0 %v300
  %v394 = vpop.f32.mrf.mxu0
  %v395 = vadd.f32 0.0, %v394
  %v396 = vpop.f32.mrf.mxu0
  %397 = vdwg.mxu0
  %v398 = vadd.f32 %v210, %v330
  %v399 = vadd.f32 %v223, %v343
  %v400 = vadd.f32 %v236, %v356
  %v401 = vadd.f32 %v249, %v369
  %v402 = vadd.f32 %v262, %v382
  %v403 = vadd.f32 %v275, %v395
  %s404 = scalar_lea.vmem %s2, 24
  %v405 = vld [vmem:[%s404] sm:$0xff]
  %v406 = vpack.c.bf16 %v405, %v405
  %407 = vrot.lane.b32.xlu0 %v43, 110
  %v408 = vpop.permute.xlu0 %407
  %409 = vrot.lane.b32.xlu0 %v44, 110
  %v410 = vpop.permute.xlu0 %409
  %411 = vrot.lane.b32.xlu0 %v45, 110
  %v412 = vpop.permute.xlu0 %411
  %413 = vrot.lane.b32.xlu0 %v46, 110
  %v414 = vpop.permute.xlu0 %413
  %415 = vrot.lane.b32.xlu0 %v47, 110
  %v416 = vpop.permute.xlu0 %415
  %417 = vrot.lane.b32.xlu0 %v48, 110
  %v418 = vpop.permute.xlu0 %417
  %vm419 = vcmask 900096
  %v420 = vsel %vm419, %v408, %v410
  %v421 = vsel %vm419, %v410, %v412
  %v422 = vsel %vm419, %v412, %v414
  %v423 = vsel %vm419, %v414, %v416
  %v424 = vsel %vm419, %v416, %v418
  %v426 = vsel %vm78, %v406, 0
  %v429 = vsel %vm82, %v420, 0
  %v432 = vsel %vm82, %v421, 0
  %v435 = vsel %vm82, %v422, 0
  %v438 = vsel %vm82, %v423, 0
  %v441 = vsel %vm82, %v424, 0
  %v444 = vsel %vm82, %v418, 0
  %446 = vmatpush.bf16.msra.mxu0 0
  %447 = vmatpush.bf16.msra.mxu0 0
  %448 = vmatpush.bf16.msra.mxu0 0
  %449 = vmatpush.bf16.msra.mxu0 0
  %450 = vmatpush.bf16.msra.mxu0 0
  %451 = vmatpush.bf16.msra.mxu0 0
  %452 = vmatpush.bf16.msra.mxu0 0
  %453 = vmatpush.bf16.msra.mxu0 %v429
  %454 = vmatmul.bf16.gmra.mxu0 %v426
  %v455 = vpop.f32.mrf.mxu0
  %v456 = vadd.f32 0.0, %v455
  %v457 = vpop.f32.mrf.mxu0
  %458 = vdwg.mxu0
  %459 = vmatpush.bf16.msra.mxu0 0
  %460 = vmatpush.bf16.msra.mxu0 0
  %461 = vmatpush.bf16.msra.mxu0 0
  %462 = vmatpush.bf16.msra.mxu0 0
  %463 = vmatpush.bf16.msra.mxu0 0
  %464 = vmatpush.bf16.msra.mxu0 0
  %465 = vmatpush.bf16.msra.mxu0 0
  %466 = vmatpush.bf16.msra.mxu0 %v432
  %467 = vmatmul.bf16.gmra.mxu0 %v426
  %v468 = vpop.f32.mrf.mxu0
  %v469 = vadd.f32 0.0, %v468
  %v470 = vpop.f32.mrf.mxu0
  %471 = vdwg.mxu0
  %472 = vmatpush.bf16.msra.mxu0 0
  %473 = vmatpush.bf16.msra.mxu0 0
  %474 = vmatpush.bf16.msra.mxu0 0
  %475 = vmatpush.bf16.msra.mxu0 0
  %476 = vmatpush.bf16.msra.mxu0 0
  %477 = vmatpush.bf16.msra.mxu0 0
  %478 = vmatpush.bf16.msra.mxu0 0
  %479 = vmatpush.bf16.msra.mxu0 %v435
  %480 = vmatmul.bf16.gmra.mxu0 %v426
  %v481 = vpop.f32.mrf.mxu0
  %v482 = vadd.f32 0.0, %v481
  %v483 = vpop.f32.mrf.mxu0
  %484 = vdwg.mxu0
  %485 = vmatpush.bf16.msra.mxu0 0
  %486 = vmatpush.bf16.msra.mxu0 0
  %487 = vmatpush.bf16.msra.mxu0 0
  %488 = vmatpush.bf16.msra.mxu0 0
  %489 = vmatpush.bf16.msra.mxu0 0
  %490 = vmatpush.bf16.msra.mxu0 0
  %491 = vmatpush.bf16.msra.mxu0 0
  %492 = vmatpush.bf16.msra.mxu0 %v438
  %493 = vmatmul.bf16.gmra.mxu0 %v426
  %v494 = vpop.f32.mrf.mxu0
  %v495 = vadd.f32 0.0, %v494
  %v496 = vpop.f32.mrf.mxu0
  %497 = vdwg.mxu0
  %498 = vmatpush.bf16.msra.mxu0 0
  %499 = vmatpush.bf16.msra.mxu0 0
  %500 = vmatpush.bf16.msra.mxu0 0
  %501 = vmatpush.bf16.msra.mxu0 0
  %502 = vmatpush.bf16.msra.mxu0 0
  %503 = vmatpush.bf16.msra.mxu0 0
  %504 = vmatpush.bf16.msra.mxu0 0
  %505 = vmatpush.bf16.msra.mxu0 %v441
  %506 = vmatmul.bf16.gmra.mxu0 %v426
  %v507 = vpop.f32.mrf.mxu0
  %v508 = vadd.f32 0.0, %v507
  %v509 = vpop.f32.mrf.mxu0
  %510 = vdwg.mxu0
  %511 = vmatpush.bf16.msra.mxu0 0
  %512 = vmatpush.bf16.msra.mxu0 0
  %513 = vmatpush.bf16.msra.mxu0 0
  %514 = vmatpush.bf16.msra.mxu0 0
  %515 = vmatpush.bf16.msra.mxu0 0
  %516 = vmatpush.bf16.msra.mxu0 0
  %517 = vmatpush.bf16.msra.mxu0 0
  %518 = vmatpush.bf16.msra.mxu0 %v444
  %519 = vmatmul.bf16.gmra.mxu0 %v426
  %v520 = vpop.f32.mrf.mxu0
  %v521 = vadd.f32 0.0, %v520
  %v522 = vpop.f32.mrf.mxu0
  %523 = vdwg.mxu0
  %v524 = vadd.f32 %v398, %v456
  %v525 = vadd.f32 %v399, %v469
  %v526 = vadd.f32 %v400, %v482
  %v527 = vadd.f32 %v401, %v495
  %v528 = vadd.f32 %v402, %v508
  %v529 = vadd.f32 %v403, %v521
  %s530 = scalar_lea.vmem %s2, 32
  %v531 = vld [vmem:[%s530] sm:$0xff]
  %v532 = vpack.c.bf16 %v531, %v531
  %533 = vrot.lane.b32.xlu0 %v43, 109
  %v534 = vpop.permute.xlu0 %533
  %535 = vrot.lane.b32.xlu0 %v44, 109
  %v536 = vpop.permute.xlu0 %535
  %537 = vrot.lane.b32.xlu0 %v45, 109
  %v538 = vpop.permute.xlu0 %537
  %539 = vrot.lane.b32.xlu0 %v46, 109
  %v540 = vpop.permute.xlu0 %539
  %541 = vrot.lane.b32.xlu0 %v47, 109
  %v542 = vpop.permute.xlu0 %541
  %543 = vrot.lane.b32.xlu0 %v48, 109
  %v544 = vpop.permute.xlu0 %543
  %vm545 = vcmask 891904
  %v546 = vsel %vm545, %v534, %v536
  %v547 = vsel %vm545, %v536, %v538
  %v548 = vsel %vm545, %v538, %v540
  %v549 = vsel %vm545, %v540, %v542
  %v550 = vsel %vm545, %v542, %v544
  %v552 = vsel %vm78, %v532, 0
  %v555 = vsel %vm82, %v546, 0
  %v558 = vsel %vm82, %v547, 0
  %v561 = vsel %vm82, %v548, 0
  %v564 = vsel %vm82, %v549, 0
  %v567 = vsel %vm82, %v550, 0
  %v570 = vsel %vm82, %v544, 0
  %572 = vmatpush.bf16.msra.mxu0 0
  %573 = vmatpush.bf16.msra.mxu0 0
  %574 = vmatpush.bf16.msra.mxu0 0
  %575 = vmatpush.bf16.msra.mxu0 0
  %576 = vmatpush.bf16.msra.mxu0 0
  %577 = vmatpush.bf16.msra.mxu0 0
  %578 = vmatpush.bf16.msra.mxu0 0
  %579 = vmatpush.bf16.msra.mxu0 %v555
  %580 = vmatmul.bf16.gmra.mxu0 %v552
  %v581 = vpop.f32.mrf.mxu0
  %v582 = vadd.f32 0.0, %v581
  %v583 = vpop.f32.mrf.mxu0
  %584 = vdwg.mxu0
  %585 = vmatpush.bf16.msra.mxu0 0
  %586 = vmatpush.bf16.msra.mxu0 0
  %587 = vmatpush.bf16.msra.mxu0 0
  %588 = vmatpush.bf16.msra.mxu0 0
  %589 = vmatpush.bf16.msra.mxu0 0
  %590 = vmatpush.bf16.msra.mxu0 0
  %591 = vmatpush.bf16.msra.mxu0 0
  %592 = vmatpush.bf16.msra.mxu0 %v558
  %593 = vmatmul.bf16.gmra.mxu0 %v552
  %v594 = vpop.f32.mrf.mxu0
  %v595 = vadd.f32 0.0, %v594
  %v596 = vpop.f32.mrf.mxu0
  %597 = vdwg.mxu0
  %598 = vmatpush.bf16.msra.mxu0 0
  %599 = vmatpush.bf16.msra.mxu0 0
  %600 = vmatpush.bf16.msra.mxu0 0
  %601 = vmatpush.bf16.msra.mxu0 0
  %602 = vmatpush.bf16.msra.mxu0 0
  %603 = vmatpush.bf16.msra.mxu0 0
  %604 = vmatpush.bf16.msra.mxu0 0
  %605 = vmatpush.bf16.msra.mxu0 %v561
  %606 = vmatmul.bf16.gmra.mxu0 %v552
  %v607 = vpop.f32.mrf.mxu0
  %v608 = vadd.f32 0.0, %v607
  %v609 = vpop.f32.mrf.mxu0
  %610 = vdwg.mxu0
  %611 = vmatpush.bf16.msra.mxu0 0
  %612 = vmatpush.bf16.msra.mxu0 0
  %613 = vmatpush.bf16.msra.mxu0 0
  %614 = vmatpush.bf16.msra.mxu0 0
  %615 = vmatpush.bf16.msra.mxu0 0
  %616 = vmatpush.bf16.msra.mxu0 0
  %617 = vmatpush.bf16.msra.mxu0 0
  %618 = vmatpush.bf16.msra.mxu0 %v564
  %619 = vmatmul.bf16.gmra.mxu0 %v552
  %v620 = vpop.f32.mrf.mxu0
  %v621 = vadd.f32 0.0, %v620
  %v622 = vpop.f32.mrf.mxu0
  %623 = vdwg.mxu0
  %624 = vmatpush.bf16.msra.mxu0 0
  %625 = vmatpush.bf16.msra.mxu0 0
  %626 = vmatpush.bf16.msra.mxu0 0
  %627 = vmatpush.bf16.msra.mxu0 0
  %628 = vmatpush.bf16.msra.mxu0 0
  %629 = vmatpush.bf16.msra.mxu0 0
  %630 = vmatpush.bf16.msra.mxu0 0
  %631 = vmatpush.bf16.msra.mxu0 %v567
  %632 = vmatmul.bf16.gmra.mxu0 %v552
  %v633 = vpop.f32.mrf.mxu0
  %v634 = vadd.f32 0.0, %v633
  %v635 = vpop.f32.mrf.mxu0
  %636 = vdwg.mxu0
  %637 = vmatpush.bf16.msra.mxu0 0
  %638 = vmatpush.bf16.msra.mxu0 0
  %639 = vmatpush.bf16.msra.mxu0 0
  %640 = vmatpush.bf16.msra.mxu0 0
  %641 = vmatpush.bf16.msra.mxu0 0
  %642 = vmatpush.bf16.msra.mxu0 0
  %643 = vmatpush.bf16.msra.mxu0 0
  %644 = vmatpush.bf16.msra.mxu0 %v570
  %645 = vmatmul.bf16.gmra.mxu0 %v552
  %v646 = vpop.f32.mrf.mxu0
  %v647 = vadd.f32 0.0, %v646
  %v648 = vpop.f32.mrf.mxu0
  %649 = vdwg.mxu0
  %v650 = vadd.f32 %v524, %v582
  %v651 = vadd.f32 %v525, %v595
  %v652 = vadd.f32 %v526, %v608
  %v653 = vadd.f32 %v527, %v621
  %v654 = vadd.f32 %v528, %v634
  %v655 = vadd.f32 %v529, %v647
  %s656 = scalar_lea.vmem %s2, 40
  %v657 = vld [vmem:[%s656] sm:$0xff]
  %v658 = vpack.c.bf16 %v657, %v657
  %659 = vrot.lane.b32.xlu0 %v43, 108
  %v660 = vpop.permute.xlu0 %659
  %661 = vrot.lane.b32.xlu0 %v44, 108
  %v662 = vpop.permute.xlu0 %661
  %663 = vrot.lane.b32.xlu0 %v45, 108
  %v664 = vpop.permute.xlu0 %663
  %665 = vrot.lane.b32.xlu0 %v46, 108
  %v666 = vpop.permute.xlu0 %665
  %667 = vrot.lane.b32.xlu0 %v47, 108
  %v668 = vpop.permute.xlu0 %667
  %669 = vrot.lane.b32.xlu0 %v48, 108
  %v670 = vpop.permute.xlu0 %669
  %vm671 = vcmask 883712
  %v672 = vsel %vm671, %v660, %v662
  %v673 = vsel %vm671, %v662, %v664
  %v674 = vsel %vm671, %v664, %v666
  %v675 = vsel %vm671, %v666, %v668
  %v676 = vsel %vm671, %v668, %v670
  %v678 = vsel %vm78, %v658, 0
  %v681 = vsel %vm82, %v672, 0
  %v684 = vsel %vm82, %v673, 0
  %v687 = vsel %vm82, %v674, 0
  %v690 = vsel %vm82, %v675, 0
  %v693 = vsel %vm82, %v676, 0
  %v696 = vsel %vm82, %v670, 0
  %698 = vmatpush.bf16.msra.mxu0 0
  %699 = vmatpush.bf16.msra.mxu0 0
  %700 = vmatpush.bf16.msra.mxu0 0
  %701 = vmatpush.bf16.msra.mxu0 0
  %702 = vmatpush.bf16.msra.mxu0 0
  %703 = vmatpush.bf16.msra.mxu0 0
  %704 = vmatpush.bf16.msra.mxu0 0
  %705 = vmatpush.bf16.msra.mxu0 %v681
  %706 = vmatmul.bf16.gmra.mxu0 %v678
  %v707 = vpop.f32.mrf.mxu0
  %v708 = vadd.f32 0.0, %v707
  %v709 = vpop.f32.mrf.mxu0
  %710 = vdwg.mxu0
  %711 = vmatpush.bf16.msra.mxu0 0
  %712 = vmatpush.bf16.msra.mxu0 0
  %713 = vmatpush.bf16.msra.mxu0 0
  %714 = vmatpush.bf16.msra.mxu0 0
  %715 = vmatpush.bf16.msra.mxu0 0
  %716 = vmatpush.bf16.msra.mxu0 0
  %717 = vmatpush.bf16.msra.mxu0 0
  %718 = vmatpush.bf16.msra.mxu0 %v684
  %719 = vmatmul.bf16.gmra.mxu0 %v678
  %v720 = vpop.f32.mrf.mxu0
  %v721 = vadd.f32 0.0, %v720
  %v722 = vpop.f32.mrf.mxu0
  %723 = vdwg.mxu0
  %724 = vmatpush.bf16.msra.mxu0 0
  %725 = vmatpush.bf16.msra.mxu0 0
  %726 = vmatpush.bf16.msra.mxu0 0
  %727 = vmatpush.bf16.msra.mxu0 0
  %728 = vmatpush.bf16.msra.mxu0 0
  %729 = vmatpush.bf16.msra.mxu0 0
  %730 = vmatpush.bf16.msra.mxu0 0
  %731 = vmatpush.bf16.msra.mxu0 %v687
  %732 = vmatmul.bf16.gmra.mxu0 %v678
  %v733 = vpop.f32.mrf.mxu0
  %v734 = vadd.f32 0.0, %v733
  %v735 = vpop.f32.mrf.mxu0
  %736 = vdwg.mxu0
  %737 = vmatpush.bf16.msra.mxu0 0
  %738 = vmatpush.bf16.msra.mxu0 0
  %739 = vmatpush.bf16.msra.mxu0 0
  %740 = vmatpush.bf16.msra.mxu0 0
  %741 = vmatpush.bf16.msra.mxu0 0
  %742 = vmatpush.bf16.msra.mxu0 0
  %743 = vmatpush.bf16.msra.mxu0 0
  %744 = vmatpush.bf16.msra.mxu0 %v690
  %745 = vmatmul.bf16.gmra.mxu0 %v678
  %v746 = vpop.f32.mrf.mxu0
  %v747 = vadd.f32 0.0, %v746
  %v748 = vpop.f32.mrf.mxu0
  %749 = vdwg.mxu0
  %750 = vmatpush.bf16.msra.mxu0 0
  %751 = vmatpush.bf16.msra.mxu0 0
  %752 = vmatpush.bf16.msra.mxu0 0
  %753 = vmatpush.bf16.msra.mxu0 0
  %754 = vmatpush.bf16.msra.mxu0 0
  %755 = vmatpush.bf16.msra.mxu0 0
  %756 = vmatpush.bf16.msra.mxu0 0
  %757 = vmatpush.bf16.msra.mxu0 %v693
  %758 = vmatmul.bf16.gmra.mxu0 %v678
  %v759 = vpop.f32.mrf.mxu0
  %v760 = vadd.f32 0.0, %v759
  %v761 = vpop.f32.mrf.mxu0
  %762 = vdwg.mxu0
  %763 = vmatpush.bf16.msra.mxu0 0
  %764 = vmatpush.bf16.msra.mxu0 0
  %765 = vmatpush.bf16.msra.mxu0 0
  %766 = vmatpush.bf16.msra.mxu0 0
  %767 = vmatpush.bf16.msra.mxu0 0
  %768 = vmatpush.bf16.msra.mxu0 0
  %769 = vmatpush.bf16.msra.mxu0 0
  %770 = vmatpush.bf16.msra.mxu0 %v696
  %771 = vmatmul.bf16.gmra.mxu0 %v678
  %v772 = vpop.f32.mrf.mxu0
  %v773 = vadd.f32 0.0, %v772
  %v774 = vpop.f32.mrf.mxu0
  %775 = vdwg.mxu0
  %v776 = vadd.f32 %v650, %v708
  %v777 = vadd.f32 %v651, %v721
  %v778 = vadd.f32 %v652, %v734
  %v779 = vadd.f32 %v653, %v747
  %v780 = vadd.f32 %v654, %v760
  %v781 = vadd.f32 %v655, %v773
  %s782 = scalar_lea.vmem %s2, 48
  %v783 = vld [vmem:[%s782] sm:$0xff]
  %v784 = vpack.c.bf16 %v783, %v783
  %785 = vrot.lane.b32.xlu0 %v43, 92
  %v786 = vpop.permute.xlu0 %785
  %787 = vrot.lane.b32.xlu0 %v44, 92
  %v788 = vpop.permute.xlu0 %787
  %789 = vrot.lane.b32.xlu0 %v45, 92
  %v790 = vpop.permute.xlu0 %789
  %791 = vrot.lane.b32.xlu0 %v46, 92
  %v792 = vpop.permute.xlu0 %791
  %793 = vrot.lane.b32.xlu0 %v47, 92
  %v794 = vpop.permute.xlu0 %793
  %795 = vrot.lane.b32.xlu0 %v48, 92
  %v796 = vpop.permute.xlu0 %795
  %vm797 = vcmask 752640
  %v798 = vsel %vm797, %v786, %v788
  %v799 = vsel %vm797, %v788, %v790
  %v800 = vsel %vm797, %v790, %v792
  %v801 = vsel %vm797, %v792, %v794
  %v802 = vsel %vm797, %v794, %v796
  %v804 = vsel %vm78, %v784, 0
  %v807 = vsel %vm82, %v798, 0
  %v810 = vsel %vm82, %v799, 0
  %v813 = vsel %vm82, %v800, 0
  %v816 = vsel %vm82, %v801, 0
  %v819 = vsel %vm82, %v802, 0
  %v822 = vsel %vm82, %v796, 0
  %824 = vmatpush.bf16.msra.mxu0 0
  %825 = vmatpush.bf16.msra.mxu0 0
  %826 = vmatpush.bf16.msra.mxu0 0
  %827 = vmatpush.bf16.msra.mxu0 0
  %828 = vmatpush.bf16.msra.mxu0 0
  %829 = vmatpush.bf16.msra.mxu0 0
  %830 = vmatpush.bf16.msra.mxu0 0
  %831 = vmatpush.bf16.msra.mxu0 %v807
  %832 = vmatmul.bf16.gmra.mxu0 %v804
  %v833 = vpop.f32.mrf.mxu0
  %v834 = vadd.f32 0.0, %v833
  %v835 = vpop.f32.mrf.mxu0
  %836 = vdwg.mxu0
  %837 = vmatpush.bf16.msra.mxu0 0
  %838 = vmatpush.bf16.msra.mxu0 0
  %839 = vmatpush.bf16.msra.mxu0 0
  %840 = vmatpush.bf16.msra.mxu0 0
  %841 = vmatpush.bf16.msra.mxu0 0
  %842 = vmatpush.bf16.msra.mxu0 0
  %843 = vmatpush.bf16.msra.mxu0 0
  %844 = vmatpush.bf16.msra.mxu0 %v810
  %845 = vmatmul.bf16.gmra.mxu0 %v804
  %v846 = vpop.f32.mrf.mxu0
  %v847 = vadd.f32 0.0, %v846
  %v848 = vpop.f32.mrf.mxu0
  %849 = vdwg.mxu0
  %850 = vmatpush.bf16.msra.mxu0 0
  %851 = vmatpush.bf16.msra.mxu0 0
  %852 = vmatpush.bf16.msra.mxu0 0
  %853 = vmatpush.bf16.msra.mxu0 0
  %854 = vmatpush.bf16.msra.mxu0 0
  %855 = vmatpush.bf16.msra.mxu0 0
  %856 = vmatpush.bf16.msra.mxu0 0
  %857 = vmatpush.bf16.msra.mxu0 %v813
  %858 = vmatmul.bf16.gmra.mxu0 %v804
  %v859 = vpop.f32.mrf.mxu0
  %v860 = vadd.f32 0.0, %v859
  %v861 = vpop.f32.mrf.mxu0
  %862 = vdwg.mxu0
  %863 = vmatpush.bf16.msra.mxu0 0
  %864 = vmatpush.bf16.msra.mxu0 0
  %865 = vmatpush.bf16.msra.mxu0 0
  %866 = vmatpush.bf16.msra.mxu0 0
  %867 = vmatpush.bf16.msra.mxu0 0
  %868 = vmatpush.bf16.msra.mxu0 0
  %869 = vmatpush.bf16.msra.mxu0 0
  %870 = vmatpush.bf16.msra.mxu0 %v816
  %871 = vmatmul.bf16.gmra.mxu0 %v804
  %v872 = vpop.f32.mrf.mxu0
  %v873 = vadd.f32 0.0, %v872
  %v874 = vpop.f32.mrf.mxu0
  %875 = vdwg.mxu0
  %876 = vmatpush.bf16.msra.mxu0 0
  %877 = vmatpush.bf16.msra.mxu0 0
  %878 = vmatpush.bf16.msra.mxu0 0
  %879 = vmatpush.bf16.msra.mxu0 0
  %880 = vmatpush.bf16.msra.mxu0 0
  %881 = vmatpush.bf16.msra.mxu0 0
  %882 = vmatpush.bf16.msra.mxu0 0
  %883 = vmatpush.bf16.msra.mxu0 %v819
  %884 = vmatmul.bf16.gmra.mxu0 %v804
  %v885 = vpop.f32.mrf.mxu0
  %v886 = vadd.f32 0.0, %v885
  %v887 = vpop.f32.mrf.mxu0
  %888 = vdwg.mxu0
  %889 = vmatpush.bf16.msra.mxu0 0
  %890 = vmatpush.bf16.msra.mxu0 0
  %891 = vmatpush.bf16.msra.mxu0 0
  %892 = vmatpush.bf16.msra.mxu0 0
  %893 = vmatpush.bf16.msra.mxu0 0
  %894 = vmatpush.bf16.msra.mxu0 0
  %895 = vmatpush.bf16.msra.mxu0 0
  %896 = vmatpush.bf16.msra.mxu0 %v822
  %897 = vmatmul.bf16.gmra.mxu0 %v804
  %v898 = vpop.f32.mrf.mxu0
  %v899 = vadd.f32 0.0, %v898
  %v900 = vpop.f32.mrf.mxu0
  %901 = vdwg.mxu0
  %v902 = vadd.f32 %v776, %v834
  %v903 = vadd.f32 %v777, %v847
  %v904 = vadd.f32 %v778, %v860
  %v905 = vadd.f32 %v779, %v873
  %v906 = vadd.f32 %v780, %v886
  %v907 = vadd.f32 %v781, %v899
  %s908 = scalar_lea.vmem %s2, 56
  %v909 = vld [vmem:[%s908] sm:$0xff]
  %v910 = vpack.c.bf16 %v909, %v909
  %911 = vrot.lane.b32.xlu0 %v43, 91
  %v912 = vpop.permute.xlu0 %911
  %913 = vrot.lane.b32.xlu0 %v44, 91
  %v914 = vpop.permute.xlu0 %913
  %915 = vrot.lane.b32.xlu0 %v45, 91
  %v916 = vpop.permute.xlu0 %915
  %917 = vrot.lane.b32.xlu0 %v46, 91
  %v918 = vpop.permute.xlu0 %917
  %919 = vrot.lane.b32.xlu0 %v47, 91
  %v920 = vpop.permute.xlu0 %919
  %921 = vrot.lane.b32.xlu0 %v48, 91
  %v922 = vpop.permute.xlu0 %921
  %vm923 = vcmask 744448
  %v924 = vsel %vm923, %v912, %v914
  %v925 = vsel %vm923, %v914, %v916
  %v926 = vsel %vm923, %v916, %v918
  %v927 = vsel %vm923, %v918, %v920
  %v928 = vsel %vm923, %v920, %v922
  %v930 = vsel %vm78, %v910, 0
  %v933 = vsel %vm82, %v924, 0
  %v936 = vsel %vm82, %v925, 0
  %v939 = vsel %vm82, %v926, 0
  %v942 = vsel %vm82, %v927, 0
  %v945 = vsel %vm82, %v928, 0
  %v948 = vsel %vm82, %v922, 0
  %950 = vmatpush.bf16.msra.mxu0 0
  %951 = vmatpush.bf16.msra.mxu0 0
  %952 = vmatpush.bf16.msra.mxu0 0
  %953 = vmatpush.bf16.msra.mxu0 0
  %954 = vmatpush.bf16.msra.mxu0 0
  %955 = vmatpush.bf16.msra.mxu0 0
  %956 = vmatpush.bf16.msra.mxu0 0
  %957 = vmatpush.bf16.msra.mxu0 %v933
  %958 = vmatmul.bf16.gmra.mxu0 %v930
  %v959 = vpop.f32.mrf.mxu0
  %v960 = vadd.f32 0.0, %v959
  %v961 = vpop.f32.mrf.mxu0
  %962 = vdwg.mxu0
  %963 = vmatpush.bf16.msra.mxu0 0
  %964 = vmatpush.bf16.msra.mxu0 0
  %965 = vmatpush.bf16.msra.mxu0 0
  %966 = vmatpush.bf16.msra.mxu0 0
  %967 = vmatpush.bf16.msra.mxu0 0
  %968 = vmatpush.bf16.msra.mxu0 0
  %969 = vmatpush.bf16.msra.mxu0 0
  %970 = vmatpush.bf16.msra.mxu0 %v936
  %971 = vmatmul.bf16.gmra.mxu0 %v930
  %v972 = vpop.f32.mrf.mxu0
  %v973 = vadd.f32 0.0, %v972
  %v974 = vpop.f32.mrf.mxu0
  %975 = vdwg.mxu0
  %976 = vmatpush.bf16.msra.mxu0 0
  %977 = vmatpush.bf16.msra.mxu0 0
  %978 = vmatpush.bf16.msra.mxu0 0
  %979 = vmatpush.bf16.msra.mxu0 0
  %980 = vmatpush.bf16.msra.mxu0 0
  %981 = vmatpush.bf16.msra.mxu0 0
  %982 = vmatpush.bf16.msra.mxu0 0
  %983 = vmatpush.bf16.msra.mxu0 %v939
  %984 = vmatmul.bf16.gmra.mxu0 %v930
  %v985 = vpop.f32.mrf.mxu0
  %v986 = vadd.f32 0.0, %v985
  %v987 = vpop.f32.mrf.mxu0
  %988 = vdwg.mxu0
  %989 = vmatpush.bf16.msra.mxu0 0
  %990 = vmatpush.bf16.msra.mxu0 0
  %991 = vmatpush.bf16.msra.mxu0 0
  %992 = vmatpush.bf16.msra.mxu0 0
  %993 = vmatpush.bf16.msra.mxu0 0
  %994 = vmatpush.bf16.msra.mxu0 0
  %995 = vmatpush.bf16.msra.mxu0 0
  %996 = vmatpush.bf16.msra.mxu0 %v942
  %997 = vmatmul.bf16.gmra.mxu0 %v930
  %v998 = vpop.f32.mrf.mxu0
  %v999 = vadd.f32 0.0, %v998
  %v1000 = vpop.f32.mrf.mxu0
  %1001 = vdwg.mxu0
  %1002 = vmatpush.bf16.msra.mxu0 0
  %1003 = vmatpush.bf16.msra.mxu0 0
  %1004 = vmatpush.bf16.msra.mxu0 0
  %1005 = vmatpush.bf16.msra.mxu0 0
  %1006 = vmatpush.bf16.msra.mxu0 0
  %1007 = vmatpush.bf16.msra.mxu0 0
  %1008 = vmatpush.bf16.msra.mxu0 0
  %1009 = vmatpush.bf16.msra.mxu0 %v945
  %1010 = vmatmul.bf16.gmra.mxu0 %v930
  %v1011 = vpop.f32.mrf.mxu0
  %v1012 = vadd.f32 0.0, %v1011
  %v1013 = vpop.f32.mrf.mxu0
  %1014 = vdwg.mxu0
  %1015 = vmatpush.bf16.msra.mxu0 0
  %1016 = vmatpush.bf16.msra.mxu0 0
  %1017 = vmatpush.bf16.msra.mxu0 0
  %1018 = vmatpush.bf16.msra.mxu0 0
  %1019 = vmatpush.bf16.msra.mxu0 0
  %1020 = vmatpush.bf16.msra.mxu0 0
  %1021 = vmatpush.bf16.msra.mxu0 0
  %1022 = vmatpush.bf16.msra.mxu0 %v948
  %1023 = vmatmul.bf16.gmra.mxu0 %v930
  %v1024 = vpop.f32.mrf.mxu0
  %v1025 = vadd.f32 0.0, %v1024
  %v1026 = vpop.f32.mrf.mxu0
  %1027 = vdwg.mxu0
  %v1028 = vadd.f32 %v902, %v960
  %v1029 = vadd.f32 %v903, %v973
  %v1030 = vadd.f32 %v904, %v986
  %v1031 = vadd.f32 %v905, %v999
  %v1032 = vadd.f32 %v906, %v1012
  %v1033 = vadd.f32 %v907, %v1025
  %s1034 = scalar_lea.vmem %s2, 64
  %v1035 = vld [vmem:[%s1034] sm:$0xff]
  %v1036 = vpack.c.bf16 %v1035, %v1035
  %1037 = vrot.lane.b32.xlu0 %v43, 90
  %v1038 = vpop.permute.xlu0 %1037
  %1039 = vrot.lane.b32.xlu0 %v44, 90
  %v1040 = vpop.permute.xlu0 %1039
  %1041 = vrot.lane.b32.xlu0 %v45, 90
  %v1042 = vpop.permute.xlu0 %1041
  %1043 = vrot.lane.b32.xlu0 %v46, 90
  %v1044 = vpop.permute.xlu0 %1043
  %1045 = vrot.lane.b32.xlu0 %v47, 90
  %v1046 = vpop.permute.xlu0 %1045
  %1047 = vrot.lane.b32.xlu0 %v48, 90
  %v1048 = vpop.permute.xlu0 %1047
  %vm1049 = vcmask 736256
  %v1050 = vsel %vm1049, %v1038, %v1040
  %v1051 = vsel %vm1049, %v1040, %v1042
  %v1052 = vsel %vm1049, %v1042, %v1044
  %v1053 = vsel %vm1049, %v1044, %v1046
  %v1054 = vsel %vm1049, %v1046, %v1048
  %v1056 = vsel %vm78, %v1036, 0
  %v1059 = vsel %vm82, %v1050, 0
  %v1062 = vsel %vm82, %v1051, 0
  %v1065 = vsel %vm82, %v1052, 0
  %v1068 = vsel %vm82, %v1053, 0
  %v1071 = vsel %vm82, %v1054, 0
  %v1074 = vsel %vm82, %v1048, 0
  %1076 = vmatpush.bf16.msra.mxu0 0
  %1077 = vmatpush.bf16.msra.mxu0 0
  %1078 = vmatpush.bf16.msra.mxu0 0
  %1079 = vmatpush.bf16.msra.mxu0 0
  %1080 = vmatpush.bf16.msra.mxu0 0
  %1081 = vmatpush.bf16.msra.mxu0 0
  %1082 = vmatpush.bf16.msra.mxu0 0
  %1083 = vmatpush.bf16.msra.mxu0 %v1059
  %1084 = vmatmul.bf16.gmra.mxu0 %v1056
  %v1085 = vpop.f32.mrf.mxu0
  %v1086 = vadd.f32 0.0, %v1085
  %v1087 = vpop.f32.mrf.mxu0
  %1088 = vdwg.mxu0
  %1089 = vmatpush.bf16.msra.mxu0 0
  %1090 = vmatpush.bf16.msra.mxu0 0
  %1091 = vmatpush.bf16.msra.mxu0 0
  %1092 = vmatpush.bf16.msra.mxu0 0
  %1093 = vmatpush.bf16.msra.mxu0 0
  %1094 = vmatpush.bf16.msra.mxu0 0
  %1095 = vmatpush.bf16.msra.mxu0 0
  %1096 = vmatpush.bf16.msra.mxu0 %v1062
  %1097 = vmatmul.bf16.gmra.mxu0 %v1056
  %v1098 = vpop.f32.mrf.mxu0
  %v1099 = vadd.f32 0.0, %v1098
  %v1100 = vpop.f32.mrf.mxu0
  %1101 = vdwg.mxu0
  %1102 = vmatpush.bf16.msra.mxu0 0
  %1103 = vmatpush.bf16.msra.mxu0 0
  %1104 = vmatpush.bf16.msra.mxu0 0
  %1105 = vmatpush.bf16.msra.mxu0 0
  %1106 = vmatpush.bf16.msra.mxu0 0
  %1107 = vmatpush.bf16.msra.mxu0 0
  %1108 = vmatpush.bf16.msra.mxu0 0
  %1109 = vmatpush.bf16.msra.mxu0 %v1065
  %1110 = vmatmul.bf16.gmra.mxu0 %v1056
  %v1111 = vpop.f32.mrf.mxu0
  %v1112 = vadd.f32 0.0, %v1111
  %v1113 = vpop.f32.mrf.mxu0
  %1114 = vdwg.mxu0
  %1115 = vmatpush.bf16.msra.mxu0 0
  %1116 = vmatpush.bf16.msra.mxu0 0
  %1117 = vmatpush.bf16.msra.mxu0 0
  %1118 = vmatpush.bf16.msra.mxu0 0
  %1119 = vmatpush.bf16.msra.mxu0 0
  %1120 = vmatpush.bf16.msra.mxu0 0
  %1121 = vmatpush.bf16.msra.mxu0 0
  %1122 = vmatpush.bf16.msra.mxu0 %v1068
  %1123 = vmatmul.bf16.gmra.mxu0 %v1056
  %v1124 = vpop.f32.mrf.mxu0
  %v1125 = vadd.f32 0.0, %v1124
  %v1126 = vpop.f32.mrf.mxu0
  %1127 = vdwg.mxu0
  %1128 = vmatpush.bf16.msra.mxu0 0
  %1129 = vmatpush.bf16.msra.mxu0 0
  %1130 = vmatpush.bf16.msra.mxu0 0
  %1131 = vmatpush.bf16.msra.mxu0 0
  %1132 = vmatpush.bf16.msra.mxu0 0
  %1133 = vmatpush.bf16.msra.mxu0 0
  %1134 = vmatpush.bf16.msra.mxu0 0
  %1135 = vmatpush.bf16.msra.mxu0 %v1071
  %1136 = vmatmul.bf16.gmra.mxu0 %v1056
  %v1137 = vpop.f32.mrf.mxu0
  %v1138 = vadd.f32 0.0, %v1137
  %v1139 = vpop.f32.mrf.mxu0
  %1140 = vdwg.mxu0
  %1141 = vmatpush.bf16.msra.mxu0 0
  %1142 = vmatpush.bf16.msra.mxu0 0
  %1143 = vmatpush.bf16.msra.mxu0 0
  %1144 = vmatpush.bf16.msra.mxu0 0
  %1145 = vmatpush.bf16.msra.mxu0 0
  %1146 = vmatpush.bf16.msra.mxu0 0
  %1147 = vmatpush.bf16.msra.mxu0 0
  %1148 = vmatpush.bf16.msra.mxu0 %v1074
  %1149 = vmatmul.bf16.gmra.mxu0 %v1056
  %v1150 = vpop.f32.mrf.mxu0
  %v1151 = vadd.f32 0.0, %v1150
  %v1152 = vpop.f32.mrf.mxu0
  %1153 = vdwg.mxu0
  %v1154 = vadd.f32 %v1028, %v1086
  %v1155 = vadd.f32 %v1029, %v1099
  %v1156 = vadd.f32 %v1030, %v1112
  %v1157 = vadd.f32 %v1031, %v1125
  %v1158 = vadd.f32 %v1032, %v1138
  %v1159 = vadd.f32 %v1033, %v1151
  %v1160 = vld [vmem:[%s3] sm:$0xff]
  %1162 = vset.pattern.permute.xlu0 0
  %1163 = vperm.xlu0 %1162, %v1160
  %v1164 = vpop.permute.xlu0 %1163
  %v1166 = vadd.f32 %v1154, %v1164
  %v1167 = vadd.f32 %v1155, %v1164
  %v1168 = vadd.f32 %v1156, %v1164
  %v1169 = vadd.f32 %v1157, %v1164
  %v1170 = vadd.f32 %v1158, %v1164
  %v1171 = vadd.f32 %v1159, %v1164
  %v1173 = vperm.slane %v36, 0
  %v1174 = vperm.slane %v36, 1
  %v1175 = vperm.slane %v36, 2
  %v1176 = vperm.slane %v36, 3
  %v1177 = vperm.slane %v36, 4
  %v1178 = vperm.slane %v36, 5
  %v1185 = vmul.f32 %v1166, %v1173
  %v1186 = vmul.f32 %v1167, %v1174
  %v1187 = vmul.f32 %v1168, %v1175
  %v1188 = vmul.f32 %v1169, %v1176
  %v1189 = vmul.f32 %v1170, %v1177
  %v1190 = vmul.f32 %v1171, %v1178
  %v1191 = vadd.f32 %v1185, %v1186
  %v1192 = vadd.f32 %v1191, %v1187
  %v1193 = vadd.f32 %v1192, %v1188
  %v1194 = vadd.f32 %v1193, %v1189
  %vm1195 = vcmask 375808
  %v1196 = vsel %vm1195, %v1190, 0.0
  %v1197 = vadd.f32 %v1194, %v1196
  %1198 = vadd.xlane.f32.xlu0 %v1197
  %v1199 = vpop.xlane.xlu0 %1198
  %v1200 = vmul.f32 %v1199, 0.001953125
  %v1201 = vsub.f32 %v1166, %v1200
  %v1202 = vsub.f32 %v1167, %v1200
  %v1203 = vsub.f32 %v1168, %v1200
  %v1204 = vsub.f32 %v1169, %v1200
  %v1205 = vsub.f32 %v1170, %v1200
  %v1206 = vsub.f32 %v1171, %v1200
  %v1207 = vmul.f32 %v1201, %v1201
  %v1208 = vmul.f32 %v1202, %v1202
  %v1209 = vmul.f32 %v1203, %v1203
  %v1210 = vmul.f32 %v1204, %v1204
  %v1211 = vmul.f32 %v1205, %v1205
  %v1212 = vmul.f32 %v1206, %v1206
  %v1213 = vmul.f32 %v1207, %v1173
  %v1214 = vmul.f32 %v1208, %v1174
  %v1215 = vmul.f32 %v1209, %v1175
  %v1216 = vmul.f32 %v1210, %v1176
  %v1217 = vmul.f32 %v1211, %v1177
  %v1218 = vmul.f32 %v1212, %v1178
  %v1219 = vadd.f32 %v1213, %v1214
  %v1220 = vadd.f32 %v1219, %v1215
  %v1221 = vadd.f32 %v1220, %v1216
  %v1222 = vadd.f32 %v1221, %v1217
  %v1223 = vsel %vm1195, %v1218, 0.0
  %v1224 = vadd.f32 %v1222, %v1223
  %1225 = vadd.xlane.f32.xlu0 %v1224
  %v1226 = vpop.xlane.xlu0 %1225
  %v1227 = vmul.f32 %v1226, 0.001953125
  %v1228 = vld [vmem:[%s4] sm:$0xff]
  %v1229 = vadd.f32 %v1227, 1e-05
  %v1230 = vrsqrt.pop %v1229
  %v1231 = vmul.f32 %v1230, %v1229
  %v1232 = vmul.f32 %v1231, %v1230
  %v1233 = vmul.f32 0.5, %v1232
  %v1234 = vsub.f32 1.5, %v1233
  %v1235 = vmul.f32 %v1230, %v1234
  %vm1236 = vweird.f32 %v1229
  %vm1237 = vweird.f32 %v1230
  %vm1238 = vmor %vm1236, %vm1237
  %v1239 = vsel %vm1238, %v1230, %v1235
  %v1240 = vmul.f32 %v1228, %v1239
  %v1241 = vld [vmem:[%s5] sm:$0xff]
  %v1242 = vmul.f32 %v1200, %v1240
  %v1243 = vsub.f32 %v1241, %v1242
  %1245 = vset.pattern.permute.xlu0 0
  %1246 = vperm.xlu0 %1245, %v1240
  %v1247 = vpop.permute.xlu0 %1246
  %v1249 = vmul.f32 %v1166, %v1247
  %v1250 = vmul.f32 %v1167, %v1247
  %v1251 = vmul.f32 %v1168, %v1247
  %v1252 = vmul.f32 %v1169, %v1247
  %v1253 = vmul.f32 %v1170, %v1247
  %v1254 = vmul.f32 %v1171, %v1247
  %1256 = vset.pattern.permute.xlu0 0
  %1257 = vperm.xlu0 %1256, %v1243
  %v1258 = vpop.permute.xlu0 %1257
  %v1260 = vadd.f32 %v1249, %v1258
  %v1261 = vadd.f32 %v1250, %v1258
  %v1262 = vadd.f32 %v1251, %v1258
  %v1263 = vadd.f32 %v1252, %v1258
  %v1264 = vadd.f32 %v1253, %v1258
  %v1265 = vadd.f32 %v1254, %v1258
  %v1266 = vmax.f32 %v1260, 0.0
  %v1267 = vmax.f32 %v1261, 0.0
  %v1268 = vmax.f32 %v1262, 0.0
  %v1269 = vmax.f32 %v1263, 0.0
  %v1270 = vmax.f32 %v1264, 0.0
  %v1271 = vmax.f32 %v1265, 0.0
  %v1272 = vmul.f32 %v1266, %v1173
  %v1273 = vmul.f32 %v1267, %v1174
  %v1274 = vmul.f32 %v1268, %v1175
  %v1275 = vmul.f32 %v1269, %v1176
  %v1276 = vmul.f32 %v1270, %v1177
  %v1277 = vmul.f32 %v1271, %v1178
  %v1278 = vpack.c.bf16 %v1272, %v1272
  %v1279 = vpack.c.bf16 %v1273, %v1273
  %v1280 = vpack.c.bf16 %v1274, %v1274
  %v1281 = vpack.c.bf16 %v1275, %v1275
  %v1282 = vpack.c.bf16 %v1276, %v1276
  %v1283 = vpack.c.bf16 %v1277, %v1277
  %v1284 = vld [vmem:[%s6] sm:$0xff]
  %v1285 = vpack.c.bf16 %v1284, %v1284
  %s1286 = scalar_lea.vmem %s6, 8
  %v1287 = vld [vmem:[%s1286] sm:$0xff]
  %v1288 = vpack.c.bf16 %v1287, %v1287
  %1295 = vrot.lane.b32.xlu0 %v1278, 127
  %v1296 = vpop.permute.xlu0 %1295
  %1297 = vrot.lane.b32.xlu0 %v1279, 127
  %v1298 = vpop.permute.xlu0 %1297
  %1299 = vrot.lane.b32.xlu0 %v1280, 127
  %v1300 = vpop.permute.xlu0 %1299
  %1301 = vrot.lane.b32.xlu0 %v1281, 127
  %v1302 = vpop.permute.xlu0 %1301
  %1303 = vrot.lane.b32.xlu0 %v1282, 127
  %v1304 = vpop.permute.xlu0 %1303
  %1305 = vrot.lane.b32.xlu0 %v1283, 127
  %v1306 = vpop.permute.xlu0 %1305
  %v1307 = vsel %vm72, %v1296, %v1298
  %v1308 = vsel %vm72, %v1298, %v1300
  %v1309 = vsel %vm72, %v1300, %v1302
  %v1310 = vsel %vm72, %v1302, %v1304
  %v1311 = vsel %vm72, %v1304, %v1306
  %v1313 = vsel %vm78, %v1288, 0
  %v1316 = vsel %vm82, %v1307, 0
  %v1319 = vsel %vm82, %v1308, 0
  %v1322 = vsel %vm82, %v1309, 0
  %v1325 = vsel %vm82, %v1310, 0
  %v1328 = vsel %vm82, %v1311, 0
  %v1331 = vsel %vm82, %v1306, 0
  %1333 = vmatpush.bf16.msra.mxu0 0
  %1334 = vmatpush.bf16.msra.mxu0 0
  %1335 = vmatpush.bf16.msra.mxu0 0
  %1336 = vmatpush.bf16.msra.mxu0 0
  %1337 = vmatpush.bf16.msra.mxu0 0
  %1338 = vmatpush.bf16.msra.mxu0 0
  %1339 = vmatpush.bf16.msra.mxu0 0
  %1340 = vmatpush.bf16.msra.mxu0 %v1316
  %1341 = vmatmul.bf16.gmra.mxu0 %v1313
  %v1342 = vpop.f32.mrf.mxu0
  %v1343 = vadd.f32 0.0, %v1342
  %v1344 = vpop.f32.mrf.mxu0
  %1345 = vdwg.mxu0
  %1346 = vmatpush.bf16.msra.mxu0 0
  %1347 = vmatpush.bf16.msra.mxu0 0
  %1348 = vmatpush.bf16.msra.mxu0 0
  %1349 = vmatpush.bf16.msra.mxu0 0
  %1350 = vmatpush.bf16.msra.mxu0 0
  %1351 = vmatpush.bf16.msra.mxu0 0
  %1352 = vmatpush.bf16.msra.mxu0 0
  %1353 = vmatpush.bf16.msra.mxu0 %v1319
  %1354 = vmatmul.bf16.gmra.mxu0 %v1313
  %v1355 = vpop.f32.mrf.mxu0
  %v1356 = vadd.f32 0.0, %v1355
  %v1357 = vpop.f32.mrf.mxu0
  %1358 = vdwg.mxu0
  %1359 = vmatpush.bf16.msra.mxu0 0
  %1360 = vmatpush.bf16.msra.mxu0 0
  %1361 = vmatpush.bf16.msra.mxu0 0
  %1362 = vmatpush.bf16.msra.mxu0 0
  %1363 = vmatpush.bf16.msra.mxu0 0
  %1364 = vmatpush.bf16.msra.mxu0 0
  %1365 = vmatpush.bf16.msra.mxu0 0
  %1366 = vmatpush.bf16.msra.mxu0 %v1322
  %1367 = vmatmul.bf16.gmra.mxu0 %v1313
  %v1368 = vpop.f32.mrf.mxu0
  %v1369 = vadd.f32 0.0, %v1368
  %v1370 = vpop.f32.mrf.mxu0
  %1371 = vdwg.mxu0
  %1372 = vmatpush.bf16.msra.mxu0 0
  %1373 = vmatpush.bf16.msra.mxu0 0
  %1374 = vmatpush.bf16.msra.mxu0 0
  %1375 = vmatpush.bf16.msra.mxu0 0
  %1376 = vmatpush.bf16.msra.mxu0 0
  %1377 = vmatpush.bf16.msra.mxu0 0
  %1378 = vmatpush.bf16.msra.mxu0 0
  %1379 = vmatpush.bf16.msra.mxu0 %v1325
  %1380 = vmatmul.bf16.gmra.mxu0 %v1313
  %v1381 = vpop.f32.mrf.mxu0
  %v1382 = vadd.f32 0.0, %v1381
  %v1383 = vpop.f32.mrf.mxu0
  %1384 = vdwg.mxu0
  %1385 = vmatpush.bf16.msra.mxu0 0
  %1386 = vmatpush.bf16.msra.mxu0 0
  %1387 = vmatpush.bf16.msra.mxu0 0
  %1388 = vmatpush.bf16.msra.mxu0 0
  %1389 = vmatpush.bf16.msra.mxu0 0
  %1390 = vmatpush.bf16.msra.mxu0 0
  %1391 = vmatpush.bf16.msra.mxu0 0
  %1392 = vmatpush.bf16.msra.mxu0 %v1328
  %1393 = vmatmul.bf16.gmra.mxu0 %v1313
  %v1394 = vpop.f32.mrf.mxu0
  %v1395 = vadd.f32 0.0, %v1394
  %v1396 = vpop.f32.mrf.mxu0
  %1397 = vdwg.mxu0
  %1398 = vmatpush.bf16.msra.mxu0 0
  %1399 = vmatpush.bf16.msra.mxu0 0
  %1400 = vmatpush.bf16.msra.mxu0 0
  %1401 = vmatpush.bf16.msra.mxu0 0
  %1402 = vmatpush.bf16.msra.mxu0 0
  %1403 = vmatpush.bf16.msra.mxu0 0
  %1404 = vmatpush.bf16.msra.mxu0 0
  %1405 = vmatpush.bf16.msra.mxu0 %v1331
  %1406 = vmatmul.bf16.gmra.mxu0 %v1313
  %v1407 = vpop.f32.mrf.mxu0
  %v1408 = vadd.f32 0.0, %v1407
  %v1409 = vpop.f32.mrf.mxu0
  %1410 = vdwg.mxu0
  %v1412 = vsel %vm78, %v1285, 0
  %v1415 = vsel %vm82, %v1278, 0
  %v1418 = vsel %vm82, %v1279, 0
  %v1421 = vsel %vm82, %v1280, 0
  %v1424 = vsel %vm82, %v1281, 0
  %v1427 = vsel %vm82, %v1282, 0
  %v1430 = vsel %vm82, %v1283, 0
  %1432 = vmatpush.bf16.msra.mxu0 0
  %1433 = vmatpush.bf16.msra.mxu0 0
  %1434 = vmatpush.bf16.msra.mxu0 0
  %1435 = vmatpush.bf16.msra.mxu0 0
  %1436 = vmatpush.bf16.msra.mxu0 0
  %1437 = vmatpush.bf16.msra.mxu0 0
  %1438 = vmatpush.bf16.msra.mxu0 0
  %1439 = vmatpush.bf16.msra.mxu0 %v1415
  %1440 = vmatmul.bf16.gmra.mxu0 %v1412
  %v1441 = vpop.f32.mrf.mxu0
  %v1442 = vadd.f32 %v1343, %v1441
  %v1443 = vpop.f32.mrf.mxu0
  %1444 = vdwg.mxu0
  %1445 = vmatpush.bf16.msra.mxu0 0
  %1446 = vmatpush.bf16.msra.mxu0 0
  %1447 = vmatpush.bf16.msra.mxu0 0
  %1448 = vmatpush.bf16.msra.mxu0 0
  %1449 = vmatpush.bf16.msra.mxu0 0
  %1450 = vmatpush.bf16.msra.mxu0 0
  %1451 = vmatpush.bf16.msra.mxu0 0
  %1452 = vmatpush.bf16.msra.mxu0 %v1418
  %1453 = vmatmul.bf16.gmra.mxu0 %v1412
  %v1454 = vpop.f32.mrf.mxu0
  %v1455 = vadd.f32 %v1356, %v1454
  %v1456 = vpop.f32.mrf.mxu0
  %1457 = vdwg.mxu0
  %1458 = vmatpush.bf16.msra.mxu0 0
  %1459 = vmatpush.bf16.msra.mxu0 0
  %1460 = vmatpush.bf16.msra.mxu0 0
  %1461 = vmatpush.bf16.msra.mxu0 0
  %1462 = vmatpush.bf16.msra.mxu0 0
  %1463 = vmatpush.bf16.msra.mxu0 0
  %1464 = vmatpush.bf16.msra.mxu0 0
  %1465 = vmatpush.bf16.msra.mxu0 %v1421
  %1466 = vmatmul.bf16.gmra.mxu0 %v1412
  %v1467 = vpop.f32.mrf.mxu0
  %v1468 = vadd.f32 %v1369, %v1467
  %v1469 = vpop.f32.mrf.mxu0
  %1470 = vdwg.mxu0
  %1471 = vmatpush.bf16.msra.mxu0 0
  %1472 = vmatpush.bf16.msra.mxu0 0
  %1473 = vmatpush.bf16.msra.mxu0 0
  %1474 = vmatpush.bf16.msra.mxu0 0
  %1475 = vmatpush.bf16.msra.mxu0 0
  %1476 = vmatpush.bf16.msra.mxu0 0
  %1477 = vmatpush.bf16.msra.mxu0 0
  %1478 = vmatpush.bf16.msra.mxu0 %v1424
  %1479 = vmatmul.bf16.gmra.mxu0 %v1412
  %v1480 = vpop.f32.mrf.mxu0
  %v1481 = vadd.f32 %v1382, %v1480
  %v1482 = vpop.f32.mrf.mxu0
  %1483 = vdwg.mxu0
  %1484 = vmatpush.bf16.msra.mxu0 0
  %1485 = vmatpush.bf16.msra.mxu0 0
  %1486 = vmatpush.bf16.msra.mxu0 0
  %1487 = vmatpush.bf16.msra.mxu0 0
  %1488 = vmatpush.bf16.msra.mxu0 0
  %1489 = vmatpush.bf16.msra.mxu0 0
  %1490 = vmatpush.bf16.msra.mxu0 0
  %1491 = vmatpush.bf16.msra.mxu0 %v1427
  %1492 = vmatmul.bf16.gmra.mxu0 %v1412
  %v1493 = vpop.f32.mrf.mxu0
  %v1494 = vadd.f32 %v1395, %v1493
  %v1495 = vpop.f32.mrf.mxu0
  %1496 = vdwg.mxu0
  %1497 = vmatpush.bf16.msra.mxu0 0
  %1498 = vmatpush.bf16.msra.mxu0 0
  %1499 = vmatpush.bf16.msra.mxu0 0
  %1500 = vmatpush.bf16.msra.mxu0 0
  %1501 = vmatpush.bf16.msra.mxu0 0
  %1502 = vmatpush.bf16.msra.mxu0 0
  %1503 = vmatpush.bf16.msra.mxu0 0
  %1504 = vmatpush.bf16.msra.mxu0 %v1430
  %1505 = vmatmul.bf16.gmra.mxu0 %v1412
  %v1506 = vpop.f32.mrf.mxu0
  %v1507 = vadd.f32 %v1408, %v1506
  %v1508 = vpop.f32.mrf.mxu0
  %1509 = vdwg.mxu0
  %s1510 = scalar_lea.vmem %s6, 16
  %v1511 = vld [vmem:[%s1510] sm:$0xff]
  %v1512 = vpack.c.bf16 %v1511, %v1511
  %1513 = vrot.lane.b32.xlu0 %v1278, 126
  %v1514 = vpop.permute.xlu0 %1513
  %1515 = vrot.lane.b32.xlu0 %v1279, 126
  %v1516 = vpop.permute.xlu0 %1515
  %1517 = vrot.lane.b32.xlu0 %v1280, 126
  %v1518 = vpop.permute.xlu0 %1517
  %1519 = vrot.lane.b32.xlu0 %v1281, 126
  %v1520 = vpop.permute.xlu0 %1519
  %1521 = vrot.lane.b32.xlu0 %v1282, 126
  %v1522 = vpop.permute.xlu0 %1521
  %1523 = vrot.lane.b32.xlu0 %v1283, 126
  %v1524 = vpop.permute.xlu0 %1523
  %v1525 = vsel %vm293, %v1514, %v1516
  %v1526 = vsel %vm293, %v1516, %v1518
  %v1527 = vsel %vm293, %v1518, %v1520
  %v1528 = vsel %vm293, %v1520, %v1522
  %v1529 = vsel %vm293, %v1522, %v1524
  %v1531 = vsel %vm78, %v1512, 0
  %v1534 = vsel %vm82, %v1525, 0
  %v1537 = vsel %vm82, %v1526, 0
  %v1540 = vsel %vm82, %v1527, 0
  %v1543 = vsel %vm82, %v1528, 0
  %v1546 = vsel %vm82, %v1529, 0
  %v1549 = vsel %vm82, %v1524, 0
  %1551 = vmatpush.bf16.msra.mxu0 0
  %1552 = vmatpush.bf16.msra.mxu0 0
  %1553 = vmatpush.bf16.msra.mxu0 0
  %1554 = vmatpush.bf16.msra.mxu0 0
  %1555 = vmatpush.bf16.msra.mxu0 0
  %1556 = vmatpush.bf16.msra.mxu0 0
  %1557 = vmatpush.bf16.msra.mxu0 0
  %1558 = vmatpush.bf16.msra.mxu0 %v1534
  %1559 = vmatmul.bf16.gmra.mxu0 %v1531
  %v1560 = vpop.f32.mrf.mxu0
  %v1561 = vadd.f32 0.0, %v1560
  %v1562 = vpop.f32.mrf.mxu0
  %1563 = vdwg.mxu0
  %1564 = vmatpush.bf16.msra.mxu0 0
  %1565 = vmatpush.bf16.msra.mxu0 0
  %1566 = vmatpush.bf16.msra.mxu0 0
  %1567 = vmatpush.bf16.msra.mxu0 0
  %1568 = vmatpush.bf16.msra.mxu0 0
  %1569 = vmatpush.bf16.msra.mxu0 0
  %1570 = vmatpush.bf16.msra.mxu0 0
  %1571 = vmatpush.bf16.msra.mxu0 %v1537
  %1572 = vmatmul.bf16.gmra.mxu0 %v1531
  %v1573 = vpop.f32.mrf.mxu0
  %v1574 = vadd.f32 0.0, %v1573
  %v1575 = vpop.f32.mrf.mxu0
  %1576 = vdwg.mxu0
  %1577 = vmatpush.bf16.msra.mxu0 0
  %1578 = vmatpush.bf16.msra.mxu0 0
  %1579 = vmatpush.bf16.msra.mxu0 0
  %1580 = vmatpush.bf16.msra.mxu0 0
  %1581 = vmatpush.bf16.msra.mxu0 0
  %1582 = vmatpush.bf16.msra.mxu0 0
  %1583 = vmatpush.bf16.msra.mxu0 0
  %1584 = vmatpush.bf16.msra.mxu0 %v1540
  %1585 = vmatmul.bf16.gmra.mxu0 %v1531
  %v1586 = vpop.f32.mrf.mxu0
  %v1587 = vadd.f32 0.0, %v1586
  %v1588 = vpop.f32.mrf.mxu0
  %1589 = vdwg.mxu0
  %1590 = vmatpush.bf16.msra.mxu0 0
  %1591 = vmatpush.bf16.msra.mxu0 0
  %1592 = vmatpush.bf16.msra.mxu0 0
  %1593 = vmatpush.bf16.msra.mxu0 0
  %1594 = vmatpush.bf16.msra.mxu0 0
  %1595 = vmatpush.bf16.msra.mxu0 0
  %1596 = vmatpush.bf16.msra.mxu0 0
  %1597 = vmatpush.bf16.msra.mxu0 %v1543
  %1598 = vmatmul.bf16.gmra.mxu0 %v1531
  %v1599 = vpop.f32.mrf.mxu0
  %v1600 = vadd.f32 0.0, %v1599
  %v1601 = vpop.f32.mrf.mxu0
  %1602 = vdwg.mxu0
  %1603 = vmatpush.bf16.msra.mxu0 0
  %1604 = vmatpush.bf16.msra.mxu0 0
  %1605 = vmatpush.bf16.msra.mxu0 0
  %1606 = vmatpush.bf16.msra.mxu0 0
  %1607 = vmatpush.bf16.msra.mxu0 0
  %1608 = vmatpush.bf16.msra.mxu0 0
  %1609 = vmatpush.bf16.msra.mxu0 0
  %1610 = vmatpush.bf16.msra.mxu0 %v1546
  %1611 = vmatmul.bf16.gmra.mxu0 %v1531
  %v1612 = vpop.f32.mrf.mxu0
  %v1613 = vadd.f32 0.0, %v1612
  %v1614 = vpop.f32.mrf.mxu0
  %1615 = vdwg.mxu0
  %1616 = vmatpush.bf16.msra.mxu0 0
  %1617 = vmatpush.bf16.msra.mxu0 0
  %1618 = vmatpush.bf16.msra.mxu0 0
  %1619 = vmatpush.bf16.msra.mxu0 0
  %1620 = vmatpush.bf16.msra.mxu0 0
  %1621 = vmatpush.bf16.msra.mxu0 0
  %1622 = vmatpush.bf16.msra.mxu0 0
  %1623 = vmatpush.bf16.msra.mxu0 %v1549
  %1624 = vmatmul.bf16.gmra.mxu0 %v1531
  %v1625 = vpop.f32.mrf.mxu0
  %v1626 = vadd.f32 0.0, %v1625
  %v1627 = vpop.f32.mrf.mxu0
  %1628 = vdwg.mxu0
  %v1629 = vadd.f32 %v1442, %v1561
  %v1630 = vadd.f32 %v1455, %v1574
  %v1631 = vadd.f32 %v1468, %v1587
  %v1632 = vadd.f32 %v1481, %v1600
  %v1633 = vadd.f32 %v1494, %v1613
  %v1634 = vadd.f32 %v1507, %v1626
  %s1635 = scalar_lea.vmem %s6, 24
  %v1636 = vld [vmem:[%s1635] sm:$0xff]
  %v1637 = vpack.c.bf16 %v1636, %v1636
  %1638 = vrot.lane.b32.xlu0 %v1278, 110
  %v1639 = vpop.permute.xlu0 %1638
  %1640 = vrot.lane.b32.xlu0 %v1279, 110
  %v1641 = vpop.permute.xlu0 %1640
  %1642 = vrot.lane.b32.xlu0 %v1280, 110
  %v1643 = vpop.permute.xlu0 %1642
  %1644 = vrot.lane.b32.xlu0 %v1281, 110
  %v1645 = vpop.permute.xlu0 %1644
  %1646 = vrot.lane.b32.xlu0 %v1282, 110
  %v1647 = vpop.permute.xlu0 %1646
  %1648 = vrot.lane.b32.xlu0 %v1283, 110
  %v1649 = vpop.permute.xlu0 %1648
  %v1650 = vsel %vm419, %v1639, %v1641
  %v1651 = vsel %vm419, %v1641, %v1643
  %v1652 = vsel %vm419, %v1643, %v1645
  %v1653 = vsel %vm419, %v1645, %v1647
  %v1654 = vsel %vm419, %v1647, %v1649
  %v1656 = vsel %vm78, %v1637, 0
  %v1659 = vsel %vm82, %v1650, 0
  %v1662 = vsel %vm82, %v1651, 0
  %v1665 = vsel %vm82, %v1652, 0
  %v1668 = vsel %vm82, %v1653, 0
  %v1671 = vsel %vm82, %v1654, 0
  %v1674 = vsel %vm82, %v1649, 0
  %1676 = vmatpush.bf16.msra.mxu0 0
  %1677 = vmatpush.bf16.msra.mxu0 0
  %1678 = vmatpush.bf16.msra.mxu0 0
  %1679 = vmatpush.bf16.msra.mxu0 0
  %1680 = vmatpush.bf16.msra.mxu0 0
  %1681 = vmatpush.bf16.msra.mxu0 0
  %1682 = vmatpush.bf16.msra.mxu0 0
  %1683 = vmatpush.bf16.msra.mxu0 %v1659
  %1684 = vmatmul.bf16.gmra.mxu0 %v1656
  %v1685 = vpop.f32.mrf.mxu0
  %v1686 = vadd.f32 0.0, %v1685
  %v1687 = vpop.f32.mrf.mxu0
  %1688 = vdwg.mxu0
  %1689 = vmatpush.bf16.msra.mxu0 0
  %1690 = vmatpush.bf16.msra.mxu0 0
  %1691 = vmatpush.bf16.msra.mxu0 0
  %1692 = vmatpush.bf16.msra.mxu0 0
  %1693 = vmatpush.bf16.msra.mxu0 0
  %1694 = vmatpush.bf16.msra.mxu0 0
  %1695 = vmatpush.bf16.msra.mxu0 0
  %1696 = vmatpush.bf16.msra.mxu0 %v1662
  %1697 = vmatmul.bf16.gmra.mxu0 %v1656
  %v1698 = vpop.f32.mrf.mxu0
  %v1699 = vadd.f32 0.0, %v1698
  %v1700 = vpop.f32.mrf.mxu0
  %1701 = vdwg.mxu0
  %1702 = vmatpush.bf16.msra.mxu0 0
  %1703 = vmatpush.bf16.msra.mxu0 0
  %1704 = vmatpush.bf16.msra.mxu0 0
  %1705 = vmatpush.bf16.msra.mxu0 0
  %1706 = vmatpush.bf16.msra.mxu0 0
  %1707 = vmatpush.bf16.msra.mxu0 0
  %1708 = vmatpush.bf16.msra.mxu0 0
  %1709 = vmatpush.bf16.msra.mxu0 %v1665
  %1710 = vmatmul.bf16.gmra.mxu0 %v1656
  %v1711 = vpop.f32.mrf.mxu0
  %v1712 = vadd.f32 0.0, %v1711
  %v1713 = vpop.f32.mrf.mxu0
  %1714 = vdwg.mxu0
  %1715 = vmatpush.bf16.msra.mxu0 0
  %1716 = vmatpush.bf16.msra.mxu0 0
  %1717 = vmatpush.bf16.msra.mxu0 0
  %1718 = vmatpush.bf16.msra.mxu0 0
  %1719 = vmatpush.bf16.msra.mxu0 0
  %1720 = vmatpush.bf16.msra.mxu0 0
  %1721 = vmatpush.bf16.msra.mxu0 0
  %1722 = vmatpush.bf16.msra.mxu0 %v1668
  %1723 = vmatmul.bf16.gmra.mxu0 %v1656
  %v1724 = vpop.f32.mrf.mxu0
  %v1725 = vadd.f32 0.0, %v1724
  %v1726 = vpop.f32.mrf.mxu0
  %1727 = vdwg.mxu0
  %1728 = vmatpush.bf16.msra.mxu0 0
  %1729 = vmatpush.bf16.msra.mxu0 0
  %1730 = vmatpush.bf16.msra.mxu0 0
  %1731 = vmatpush.bf16.msra.mxu0 0
  %1732 = vmatpush.bf16.msra.mxu0 0
  %1733 = vmatpush.bf16.msra.mxu0 0
  %1734 = vmatpush.bf16.msra.mxu0 0
  %1735 = vmatpush.bf16.msra.mxu0 %v1671
  %1736 = vmatmul.bf16.gmra.mxu0 %v1656
  %v1737 = vpop.f32.mrf.mxu0
  %v1738 = vadd.f32 0.0, %v1737
  %v1739 = vpop.f32.mrf.mxu0
  %1740 = vdwg.mxu0
  %1741 = vmatpush.bf16.msra.mxu0 0
  %1742 = vmatpush.bf16.msra.mxu0 0
  %1743 = vmatpush.bf16.msra.mxu0 0
  %1744 = vmatpush.bf16.msra.mxu0 0
  %1745 = vmatpush.bf16.msra.mxu0 0
  %1746 = vmatpush.bf16.msra.mxu0 0
  %1747 = vmatpush.bf16.msra.mxu0 0
  %1748 = vmatpush.bf16.msra.mxu0 %v1674
  %1749 = vmatmul.bf16.gmra.mxu0 %v1656
  %v1750 = vpop.f32.mrf.mxu0
  %v1751 = vadd.f32 0.0, %v1750
  %v1752 = vpop.f32.mrf.mxu0
  %1753 = vdwg.mxu0
  %v1754 = vadd.f32 %v1629, %v1686
  %v1755 = vadd.f32 %v1630, %v1699
  %v1756 = vadd.f32 %v1631, %v1712
  %v1757 = vadd.f32 %v1632, %v1725
  %v1758 = vadd.f32 %v1633, %v1738
  %v1759 = vadd.f32 %v1634, %v1751
  %s1760 = scalar_lea.vmem %s6, 32
  %v1761 = vld [vmem:[%s1760] sm:$0xff]
  %v1762 = vpack.c.bf16 %v1761, %v1761
  %1763 = vrot.lane.b32.xlu0 %v1278, 109
  %v1764 = vpop.permute.xlu0 %1763
  %1765 = vrot.lane.b32.xlu0 %v1279, 109
  %v1766 = vpop.permute.xlu0 %1765
  %1767 = vrot.lane.b32.xlu0 %v1280, 109
  %v1768 = vpop.permute.xlu0 %1767
  %1769 = vrot.lane.b32.xlu0 %v1281, 109
  %v1770 = vpop.permute.xlu0 %1769
  %1771 = vrot.lane.b32.xlu0 %v1282, 109
  %v1772 = vpop.permute.xlu0 %1771
  %1773 = vrot.lane.b32.xlu0 %v1283, 109
  %v1774 = vpop.permute.xlu0 %1773
  %v1775 = vsel %vm545, %v1764, %v1766
  %v1776 = vsel %vm545, %v1766, %v1768
  %v1777 = vsel %vm545, %v1768, %v1770
  %v1778 = vsel %vm545, %v1770, %v1772
  %v1779 = vsel %vm545, %v1772, %v1774
  %v1781 = vsel %vm78, %v1762, 0
  %v1784 = vsel %vm82, %v1775, 0
  %v1787 = vsel %vm82, %v1776, 0
  %v1790 = vsel %vm82, %v1777, 0
  %v1793 = vsel %vm82, %v1778, 0
  %v1796 = vsel %vm82, %v1779, 0
  %v1799 = vsel %vm82, %v1774, 0
  %1801 = vmatpush.bf16.msra.mxu0 0
  %1802 = vmatpush.bf16.msra.mxu0 0
  %1803 = vmatpush.bf16.msra.mxu0 0
  %1804 = vmatpush.bf16.msra.mxu0 0
  %1805 = vmatpush.bf16.msra.mxu0 0
  %1806 = vmatpush.bf16.msra.mxu0 0
  %1807 = vmatpush.bf16.msra.mxu0 0
  %1808 = vmatpush.bf16.msra.mxu0 %v1784
  %1809 = vmatmul.bf16.gmra.mxu0 %v1781
  %v1810 = vpop.f32.mrf.mxu0
  %v1811 = vadd.f32 0.0, %v1810
  %v1812 = vpop.f32.mrf.mxu0
  %1813 = vdwg.mxu0
  %1814 = vmatpush.bf16.msra.mxu0 0
  %1815 = vmatpush.bf16.msra.mxu0 0
  %1816 = vmatpush.bf16.msra.mxu0 0
  %1817 = vmatpush.bf16.msra.mxu0 0
  %1818 = vmatpush.bf16.msra.mxu0 0
  %1819 = vmatpush.bf16.msra.mxu0 0
  %1820 = vmatpush.bf16.msra.mxu0 0
  %1821 = vmatpush.bf16.msra.mxu0 %v1787
  %1822 = vmatmul.bf16.gmra.mxu0 %v1781
  %v1823 = vpop.f32.mrf.mxu0
  %v1824 = vadd.f32 0.0, %v1823
  %v1825 = vpop.f32.mrf.mxu0
  %1826 = vdwg.mxu0
  %1827 = vmatpush.bf16.msra.mxu0 0
  %1828 = vmatpush.bf16.msra.mxu0 0
  %1829 = vmatpush.bf16.msra.mxu0 0
  %1830 = vmatpush.bf16.msra.mxu0 0
  %1831 = vmatpush.bf16.msra.mxu0 0
  %1832 = vmatpush.bf16.msra.mxu0 0
  %1833 = vmatpush.bf16.msra.mxu0 0
  %1834 = vmatpush.bf16.msra.mxu0 %v1790
  %1835 = vmatmul.bf16.gmra.mxu0 %v1781
  %v1836 = vpop.f32.mrf.mxu0
  %v1837 = vadd.f32 0.0, %v1836
  %v1838 = vpop.f32.mrf.mxu0
  %1839 = vdwg.mxu0
  %1840 = vmatpush.bf16.msra.mxu0 0
  %1841 = vmatpush.bf16.msra.mxu0 0
  %1842 = vmatpush.bf16.msra.mxu0 0
  %1843 = vmatpush.bf16.msra.mxu0 0
  %1844 = vmatpush.bf16.msra.mxu0 0
  %1845 = vmatpush.bf16.msra.mxu0 0
  %1846 = vmatpush.bf16.msra.mxu0 0
  %1847 = vmatpush.bf16.msra.mxu0 %v1793
  %1848 = vmatmul.bf16.gmra.mxu0 %v1781
  %v1849 = vpop.f32.mrf.mxu0
  %v1850 = vadd.f32 0.0, %v1849
  %v1851 = vpop.f32.mrf.mxu0
  %1852 = vdwg.mxu0
  %1853 = vmatpush.bf16.msra.mxu0 0
  %1854 = vmatpush.bf16.msra.mxu0 0
  %1855 = vmatpush.bf16.msra.mxu0 0
  %1856 = vmatpush.bf16.msra.mxu0 0
  %1857 = vmatpush.bf16.msra.mxu0 0
  %1858 = vmatpush.bf16.msra.mxu0 0
  %1859 = vmatpush.bf16.msra.mxu0 0
  %1860 = vmatpush.bf16.msra.mxu0 %v1796
  %1861 = vmatmul.bf16.gmra.mxu0 %v1781
  %v1862 = vpop.f32.mrf.mxu0
  %v1863 = vadd.f32 0.0, %v1862
  %v1864 = vpop.f32.mrf.mxu0
  %1865 = vdwg.mxu0
  %1866 = vmatpush.bf16.msra.mxu0 0
  %1867 = vmatpush.bf16.msra.mxu0 0
  %1868 = vmatpush.bf16.msra.mxu0 0
  %1869 = vmatpush.bf16.msra.mxu0 0
  %1870 = vmatpush.bf16.msra.mxu0 0
  %1871 = vmatpush.bf16.msra.mxu0 0
  %1872 = vmatpush.bf16.msra.mxu0 0
  %1873 = vmatpush.bf16.msra.mxu0 %v1799
  %1874 = vmatmul.bf16.gmra.mxu0 %v1781
  %v1875 = vpop.f32.mrf.mxu0
  %v1876 = vadd.f32 0.0, %v1875
  %v1877 = vpop.f32.mrf.mxu0
  %1878 = vdwg.mxu0
  %v1879 = vadd.f32 %v1754, %v1811
  %v1880 = vadd.f32 %v1755, %v1824
  %v1881 = vadd.f32 %v1756, %v1837
  %v1882 = vadd.f32 %v1757, %v1850
  %v1883 = vadd.f32 %v1758, %v1863
  %v1884 = vadd.f32 %v1759, %v1876
  %s1885 = scalar_lea.vmem %s6, 40
  %v1886 = vld [vmem:[%s1885] sm:$0xff]
  %v1887 = vpack.c.bf16 %v1886, %v1886
  %1888 = vrot.lane.b32.xlu0 %v1278, 108
  %v1889 = vpop.permute.xlu0 %1888
  %1890 = vrot.lane.b32.xlu0 %v1279, 108
  %v1891 = vpop.permute.xlu0 %1890
  %1892 = vrot.lane.b32.xlu0 %v1280, 108
  %v1893 = vpop.permute.xlu0 %1892
  %1894 = vrot.lane.b32.xlu0 %v1281, 108
  %v1895 = vpop.permute.xlu0 %1894
  %1896 = vrot.lane.b32.xlu0 %v1282, 108
  %v1897 = vpop.permute.xlu0 %1896
  %1898 = vrot.lane.b32.xlu0 %v1283, 108
  %v1899 = vpop.permute.xlu0 %1898
  %v1900 = vsel %vm671, %v1889, %v1891
  %v1901 = vsel %vm671, %v1891, %v1893
  %v1902 = vsel %vm671, %v1893, %v1895
  %v1903 = vsel %vm671, %v1895, %v1897
  %v1904 = vsel %vm671, %v1897, %v1899
  %v1906 = vsel %vm78, %v1887, 0
  %v1909 = vsel %vm82, %v1900, 0
  %v1912 = vsel %vm82, %v1901, 0
  %v1915 = vsel %vm82, %v1902, 0
  %v1918 = vsel %vm82, %v1903, 0
  %v1921 = vsel %vm82, %v1904, 0
  %v1924 = vsel %vm82, %v1899, 0
  %1926 = vmatpush.bf16.msra.mxu0 0
  %1927 = vmatpush.bf16.msra.mxu0 0
  %1928 = vmatpush.bf16.msra.mxu0 0
  %1929 = vmatpush.bf16.msra.mxu0 0
  %1930 = vmatpush.bf16.msra.mxu0 0
  %1931 = vmatpush.bf16.msra.mxu0 0
  %1932 = vmatpush.bf16.msra.mxu0 0
  %1933 = vmatpush.bf16.msra.mxu0 %v1909
  %1934 = vmatmul.bf16.gmra.mxu0 %v1906
  %v1935 = vpop.f32.mrf.mxu0
  %v1936 = vadd.f32 0.0, %v1935
  %v1937 = vpop.f32.mrf.mxu0
  %1938 = vdwg.mxu0
  %1939 = vmatpush.bf16.msra.mxu0 0
  %1940 = vmatpush.bf16.msra.mxu0 0
  %1941 = vmatpush.bf16.msra.mxu0 0
  %1942 = vmatpush.bf16.msra.mxu0 0
  %1943 = vmatpush.bf16.msra.mxu0 0
  %1944 = vmatpush.bf16.msra.mxu0 0
  %1945 = vmatpush.bf16.msra.mxu0 0
  %1946 = vmatpush.bf16.msra.mxu0 %v1912
  %1947 = vmatmul.bf16.gmra.mxu0 %v1906
  %v1948 = vpop.f32.mrf.mxu0
  %v1949 = vadd.f32 0.0, %v1948
  %v1950 = vpop.f32.mrf.mxu0
  %1951 = vdwg.mxu0
  %1952 = vmatpush.bf16.msra.mxu0 0
  %1953 = vmatpush.bf16.msra.mxu0 0
  %1954 = vmatpush.bf16.msra.mxu0 0
  %1955 = vmatpush.bf16.msra.mxu0 0
  %1956 = vmatpush.bf16.msra.mxu0 0
  %1957 = vmatpush.bf16.msra.mxu0 0
  %1958 = vmatpush.bf16.msra.mxu0 0
  %1959 = vmatpush.bf16.msra.mxu0 %v1915
  %1960 = vmatmul.bf16.gmra.mxu0 %v1906
  %v1961 = vpop.f32.mrf.mxu0
  %v1962 = vadd.f32 0.0, %v1961
  %v1963 = vpop.f32.mrf.mxu0
  %1964 = vdwg.mxu0
  %1965 = vmatpush.bf16.msra.mxu0 0
  %1966 = vmatpush.bf16.msra.mxu0 0
  %1967 = vmatpush.bf16.msra.mxu0 0
  %1968 = vmatpush.bf16.msra.mxu0 0
  %1969 = vmatpush.bf16.msra.mxu0 0
  %1970 = vmatpush.bf16.msra.mxu0 0
  %1971 = vmatpush.bf16.msra.mxu0 0
  %1972 = vmatpush.bf16.msra.mxu0 %v1918
  %1973 = vmatmul.bf16.gmra.mxu0 %v1906
  %v1974 = vpop.f32.mrf.mxu0
  %v1975 = vadd.f32 0.0, %v1974
  %v1976 = vpop.f32.mrf.mxu0
  %1977 = vdwg.mxu0
  %1978 = vmatpush.bf16.msra.mxu0 0
  %1979 = vmatpush.bf16.msra.mxu0 0
  %1980 = vmatpush.bf16.msra.mxu0 0
  %1981 = vmatpush.bf16.msra.mxu0 0
  %1982 = vmatpush.bf16.msra.mxu0 0
  %1983 = vmatpush.bf16.msra.mxu0 0
  %1984 = vmatpush.bf16.msra.mxu0 0
  %1985 = vmatpush.bf16.msra.mxu0 %v1921
  %1986 = vmatmul.bf16.gmra.mxu0 %v1906
  %v1987 = vpop.f32.mrf.mxu0
  %v1988 = vadd.f32 0.0, %v1987
  %v1989 = vpop.f32.mrf.mxu0
  %1990 = vdwg.mxu0
  %1991 = vmatpush.bf16.msra.mxu0 0
  %1992 = vmatpush.bf16.msra.mxu0 0
  %1993 = vmatpush.bf16.msra.mxu0 0
  %1994 = vmatpush.bf16.msra.mxu0 0
  %1995 = vmatpush.bf16.msra.mxu0 0
  %1996 = vmatpush.bf16.msra.mxu0 0
  %1997 = vmatpush.bf16.msra.mxu0 0
  %1998 = vmatpush.bf16.msra.mxu0 %v1924
  %1999 = vmatmul.bf16.gmra.mxu0 %v1906
  %v2000 = vpop.f32.mrf.mxu0
  %v2001 = vadd.f32 0.0, %v2000
  %v2002 = vpop.f32.mrf.mxu0
  %2003 = vdwg.mxu0
  %v2004 = vadd.f32 %v1879, %v1936
  %v2005 = vadd.f32 %v1880, %v1949
  %v2006 = vadd.f32 %v1881, %v1962
  %v2007 = vadd.f32 %v1882, %v1975
  %v2008 = vadd.f32 %v1883, %v1988
  %v2009 = vadd.f32 %v1884, %v2001
  %s2010 = scalar_lea.vmem %s6, 48
  %v2011 = vld [vmem:[%s2010] sm:$0xff]
  %v2012 = vpack.c.bf16 %v2011, %v2011
  %2013 = vrot.lane.b32.xlu0 %v1278, 92
  %v2014 = vpop.permute.xlu0 %2013
  %2015 = vrot.lane.b32.xlu0 %v1279, 92
  %v2016 = vpop.permute.xlu0 %2015
  %2017 = vrot.lane.b32.xlu0 %v1280, 92
  %v2018 = vpop.permute.xlu0 %2017
  %2019 = vrot.lane.b32.xlu0 %v1281, 92
  %v2020 = vpop.permute.xlu0 %2019
  %2021 = vrot.lane.b32.xlu0 %v1282, 92
  %v2022 = vpop.permute.xlu0 %2021
  %2023 = vrot.lane.b32.xlu0 %v1283, 92
  %v2024 = vpop.permute.xlu0 %2023
  %v2025 = vsel %vm797, %v2014, %v2016
  %v2026 = vsel %vm797, %v2016, %v2018
  %v2027 = vsel %vm797, %v2018, %v2020
  %v2028 = vsel %vm797, %v2020, %v2022
  %v2029 = vsel %vm797, %v2022, %v2024
  %v2031 = vsel %vm78, %v2012, 0
  %v2034 = vsel %vm82, %v2025, 0
  %v2037 = vsel %vm82, %v2026, 0
  %v2040 = vsel %vm82, %v2027, 0
  %v2043 = vsel %vm82, %v2028, 0
  %v2046 = vsel %vm82, %v2029, 0
  %v2049 = vsel %vm82, %v2024, 0
  %2051 = vmatpush.bf16.msra.mxu0 0
  %2052 = vmatpush.bf16.msra.mxu0 0
  %2053 = vmatpush.bf16.msra.mxu0 0
  %2054 = vmatpush.bf16.msra.mxu0 0
  %2055 = vmatpush.bf16.msra.mxu0 0
  %2056 = vmatpush.bf16.msra.mxu0 0
  %2057 = vmatpush.bf16.msra.mxu0 0
  %2058 = vmatpush.bf16.msra.mxu0 %v2034
  %2059 = vmatmul.bf16.gmra.mxu0 %v2031
  %v2060 = vpop.f32.mrf.mxu0
  %v2061 = vadd.f32 0.0, %v2060
  %v2062 = vpop.f32.mrf.mxu0
  %2063 = vdwg.mxu0
  %2064 = vmatpush.bf16.msra.mxu0 0
  %2065 = vmatpush.bf16.msra.mxu0 0
  %2066 = vmatpush.bf16.msra.mxu0 0
  %2067 = vmatpush.bf16.msra.mxu0 0
  %2068 = vmatpush.bf16.msra.mxu0 0
  %2069 = vmatpush.bf16.msra.mxu0 0
  %2070 = vmatpush.bf16.msra.mxu0 0
  %2071 = vmatpush.bf16.msra.mxu0 %v2037
  %2072 = vmatmul.bf16.gmra.mxu0 %v2031
  %v2073 = vpop.f32.mrf.mxu0
  %v2074 = vadd.f32 0.0, %v2073
  %v2075 = vpop.f32.mrf.mxu0
  %2076 = vdwg.mxu0
  %2077 = vmatpush.bf16.msra.mxu0 0
  %2078 = vmatpush.bf16.msra.mxu0 0
  %2079 = vmatpush.bf16.msra.mxu0 0
  %2080 = vmatpush.bf16.msra.mxu0 0
  %2081 = vmatpush.bf16.msra.mxu0 0
  %2082 = vmatpush.bf16.msra.mxu0 0
  %2083 = vmatpush.bf16.msra.mxu0 0
  %2084 = vmatpush.bf16.msra.mxu0 %v2040
  %2085 = vmatmul.bf16.gmra.mxu0 %v2031
  %v2086 = vpop.f32.mrf.mxu0
  %v2087 = vadd.f32 0.0, %v2086
  %v2088 = vpop.f32.mrf.mxu0
  %2089 = vdwg.mxu0
  %2090 = vmatpush.bf16.msra.mxu0 0
  %2091 = vmatpush.bf16.msra.mxu0 0
  %2092 = vmatpush.bf16.msra.mxu0 0
  %2093 = vmatpush.bf16.msra.mxu0 0
  %2094 = vmatpush.bf16.msra.mxu0 0
  %2095 = vmatpush.bf16.msra.mxu0 0
  %2096 = vmatpush.bf16.msra.mxu0 0
  %2097 = vmatpush.bf16.msra.mxu0 %v2043
  %2098 = vmatmul.bf16.gmra.mxu0 %v2031
  %v2099 = vpop.f32.mrf.mxu0
  %v2100 = vadd.f32 0.0, %v2099
  %v2101 = vpop.f32.mrf.mxu0
  %2102 = vdwg.mxu0
  %2103 = vmatpush.bf16.msra.mxu0 0
  %2104 = vmatpush.bf16.msra.mxu0 0
  %2105 = vmatpush.bf16.msra.mxu0 0
  %2106 = vmatpush.bf16.msra.mxu0 0
  %2107 = vmatpush.bf16.msra.mxu0 0
  %2108 = vmatpush.bf16.msra.mxu0 0
  %2109 = vmatpush.bf16.msra.mxu0 0
  %2110 = vmatpush.bf16.msra.mxu0 %v2046
  %2111 = vmatmul.bf16.gmra.mxu0 %v2031
  %v2112 = vpop.f32.mrf.mxu0
  %v2113 = vadd.f32 0.0, %v2112
  %v2114 = vpop.f32.mrf.mxu0
  %2115 = vdwg.mxu0
  %2116 = vmatpush.bf16.msra.mxu0 0
  %2117 = vmatpush.bf16.msra.mxu0 0
  %2118 = vmatpush.bf16.msra.mxu0 0
  %2119 = vmatpush.bf16.msra.mxu0 0
  %2120 = vmatpush.bf16.msra.mxu0 0
  %2121 = vmatpush.bf16.msra.mxu0 0
  %2122 = vmatpush.bf16.msra.mxu0 0
  %2123 = vmatpush.bf16.msra.mxu0 %v2049
  %2124 = vmatmul.bf16.gmra.mxu0 %v2031
  %v2125 = vpop.f32.mrf.mxu0
  %v2126 = vadd.f32 0.0, %v2125
  %v2127 = vpop.f32.mrf.mxu0
  %2128 = vdwg.mxu0
  %v2129 = vadd.f32 %v2004, %v2061
  %v2130 = vadd.f32 %v2005, %v2074
  %v2131 = vadd.f32 %v2006, %v2087
  %v2132 = vadd.f32 %v2007, %v2100
  %v2133 = vadd.f32 %v2008, %v2113
  %v2134 = vadd.f32 %v2009, %v2126
  %s2135 = scalar_lea.vmem %s6, 56
  %v2136 = vld [vmem:[%s2135] sm:$0xff]
  %v2137 = vpack.c.bf16 %v2136, %v2136
  %2138 = vrot.lane.b32.xlu0 %v1278, 91
  %v2139 = vpop.permute.xlu0 %2138
  %2140 = vrot.lane.b32.xlu0 %v1279, 91
  %v2141 = vpop.permute.xlu0 %2140
  %2142 = vrot.lane.b32.xlu0 %v1280, 91
  %v2143 = vpop.permute.xlu0 %2142
  %2144 = vrot.lane.b32.xlu0 %v1281, 91
  %v2145 = vpop.permute.xlu0 %2144
  %2146 = vrot.lane.b32.xlu0 %v1282, 91
  %v2147 = vpop.permute.xlu0 %2146
  %2148 = vrot.lane.b32.xlu0 %v1283, 91
  %v2149 = vpop.permute.xlu0 %2148
  %v2150 = vsel %vm923, %v2139, %v2141
  %v2151 = vsel %vm923, %v2141, %v2143
  %v2152 = vsel %vm923, %v2143, %v2145
  %v2153 = vsel %vm923, %v2145, %v2147
  %v2154 = vsel %vm923, %v2147, %v2149
  %v2156 = vsel %vm78, %v2137, 0
  %v2159 = vsel %vm82, %v2150, 0
  %v2162 = vsel %vm82, %v2151, 0
  %v2165 = vsel %vm82, %v2152, 0
  %v2168 = vsel %vm82, %v2153, 0
  %v2171 = vsel %vm82, %v2154, 0
  %v2174 = vsel %vm82, %v2149, 0
  %2176 = vmatpush.bf16.msra.mxu0 0
  %2177 = vmatpush.bf16.msra.mxu0 0
  %2178 = vmatpush.bf16.msra.mxu0 0
  %2179 = vmatpush.bf16.msra.mxu0 0
  %2180 = vmatpush.bf16.msra.mxu0 0
  %2181 = vmatpush.bf16.msra.mxu0 0
  %2182 = vmatpush.bf16.msra.mxu0 0
  %2183 = vmatpush.bf16.msra.mxu0 %v2159
  %2184 = vmatmul.bf16.gmra.mxu0 %v2156
  %v2185 = vpop.f32.mrf.mxu0
  %v2186 = vadd.f32 0.0, %v2185
  %v2187 = vpop.f32.mrf.mxu0
  %2188 = vdwg.mxu0
  %2189 = vmatpush.bf16.msra.mxu0 0
  %2190 = vmatpush.bf16.msra.mxu0 0
  %2191 = vmatpush.bf16.msra.mxu0 0
  %2192 = vmatpush.bf16.msra.mxu0 0
  %2193 = vmatpush.bf16.msra.mxu0 0
  %2194 = vmatpush.bf16.msra.mxu0 0
  %2195 = vmatpush.bf16.msra.mxu0 0
  %2196 = vmatpush.bf16.msra.mxu0 %v2162
  %2197 = vmatmul.bf16.gmra.mxu0 %v2156
  %v2198 = vpop.f32.mrf.mxu0
  %v2199 = vadd.f32 0.0, %v2198
  %v2200 = vpop.f32.mrf.mxu0
  %2201 = vdwg.mxu0
  %2202 = vmatpush.bf16.msra.mxu0 0
  %2203 = vmatpush.bf16.msra.mxu0 0
  %2204 = vmatpush.bf16.msra.mxu0 0
  %2205 = vmatpush.bf16.msra.mxu0 0
  %2206 = vmatpush.bf16.msra.mxu0 0
  %2207 = vmatpush.bf16.msra.mxu0 0
  %2208 = vmatpush.bf16.msra.mxu0 0
  %2209 = vmatpush.bf16.msra.mxu0 %v2165
  %2210 = vmatmul.bf16.gmra.mxu0 %v2156
  %v2211 = vpop.f32.mrf.mxu0
  %v2212 = vadd.f32 0.0, %v2211
  %v2213 = vpop.f32.mrf.mxu0
  %2214 = vdwg.mxu0
  %2215 = vmatpush.bf16.msra.mxu0 0
  %2216 = vmatpush.bf16.msra.mxu0 0
  %2217 = vmatpush.bf16.msra.mxu0 0
  %2218 = vmatpush.bf16.msra.mxu0 0
  %2219 = vmatpush.bf16.msra.mxu0 0
  %2220 = vmatpush.bf16.msra.mxu0 0
  %2221 = vmatpush.bf16.msra.mxu0 0
  %2222 = vmatpush.bf16.msra.mxu0 %v2168
  %2223 = vmatmul.bf16.gmra.mxu0 %v2156
  %v2224 = vpop.f32.mrf.mxu0
  %v2225 = vadd.f32 0.0, %v2224
  %v2226 = vpop.f32.mrf.mxu0
  %2227 = vdwg.mxu0
  %2228 = vmatpush.bf16.msra.mxu0 0
  %2229 = vmatpush.bf16.msra.mxu0 0
  %2230 = vmatpush.bf16.msra.mxu0 0
  %2231 = vmatpush.bf16.msra.mxu0 0
  %2232 = vmatpush.bf16.msra.mxu0 0
  %2233 = vmatpush.bf16.msra.mxu0 0
  %2234 = vmatpush.bf16.msra.mxu0 0
  %2235 = vmatpush.bf16.msra.mxu0 %v2171
  %2236 = vmatmul.bf16.gmra.mxu0 %v2156
  %v2237 = vpop.f32.mrf.mxu0
  %v2238 = vadd.f32 0.0, %v2237
  %v2239 = vpop.f32.mrf.mxu0
  %2240 = vdwg.mxu0
  %2241 = vmatpush.bf16.msra.mxu0 0
  %2242 = vmatpush.bf16.msra.mxu0 0
  %2243 = vmatpush.bf16.msra.mxu0 0
  %2244 = vmatpush.bf16.msra.mxu0 0
  %2245 = vmatpush.bf16.msra.mxu0 0
  %2246 = vmatpush.bf16.msra.mxu0 0
  %2247 = vmatpush.bf16.msra.mxu0 0
  %2248 = vmatpush.bf16.msra.mxu0 %v2174
  %2249 = vmatmul.bf16.gmra.mxu0 %v2156
  %v2250 = vpop.f32.mrf.mxu0
  %v2251 = vadd.f32 0.0, %v2250
  %v2252 = vpop.f32.mrf.mxu0
  %2253 = vdwg.mxu0
  %v2254 = vadd.f32 %v2129, %v2186
  %v2255 = vadd.f32 %v2130, %v2199
  %v2256 = vadd.f32 %v2131, %v2212
  %v2257 = vadd.f32 %v2132, %v2225
  %v2258 = vadd.f32 %v2133, %v2238
  %v2259 = vadd.f32 %v2134, %v2251
  %s2260 = scalar_lea.vmem %s6, 64
  %v2261 = vld [vmem:[%s2260] sm:$0xff]
  %v2262 = vpack.c.bf16 %v2261, %v2261
  %2263 = vrot.lane.b32.xlu0 %v1278, 90
  %v2264 = vpop.permute.xlu0 %2263
  %2265 = vrot.lane.b32.xlu0 %v1279, 90
  %v2266 = vpop.permute.xlu0 %2265
  %2267 = vrot.lane.b32.xlu0 %v1280, 90
  %v2268 = vpop.permute.xlu0 %2267
  %2269 = vrot.lane.b32.xlu0 %v1281, 90
  %v2270 = vpop.permute.xlu0 %2269
  %2271 = vrot.lane.b32.xlu0 %v1282, 90
  %v2272 = vpop.permute.xlu0 %2271
  %2273 = vrot.lane.b32.xlu0 %v1283, 90
  %v2274 = vpop.permute.xlu0 %2273
  %v2275 = vsel %vm1049, %v2264, %v2266
  %v2276 = vsel %vm1049, %v2266, %v2268
  %v2277 = vsel %vm1049, %v2268, %v2270
  %v2278 = vsel %vm1049, %v2270, %v2272
  %v2279 = vsel %vm1049, %v2272, %v2274
  %v2281 = vsel %vm78, %v2262, 0
  %v2284 = vsel %vm82, %v2275, 0
  %v2287 = vsel %vm82, %v2276, 0
  %v2290 = vsel %vm82, %v2277, 0
  %v2293 = vsel %vm82, %v2278, 0
  %v2296 = vsel %vm82, %v2279, 0
  %v2299 = vsel %vm82, %v2274, 0
  %2301 = vmatpush.bf16.msra.mxu0 0
  %2302 = vmatpush.bf16.msra.mxu0 0
  %2303 = vmatpush.bf16.msra.mxu0 0
  %2304 = vmatpush.bf16.msra.mxu0 0
  %2305 = vmatpush.bf16.msra.mxu0 0
  %2306 = vmatpush.bf16.msra.mxu0 0
  %2307 = vmatpush.bf16.msra.mxu0 0
  %2308 = vmatpush.bf16.msra.mxu0 %v2284
  %2309 = vmatmul.bf16.gmra.mxu0 %v2281
  %v2310 = vpop.f32.mrf.mxu0
  %v2311 = vadd.f32 0.0, %v2310
  %v2312 = vpop.f32.mrf.mxu0
  %2313 = vdwg.mxu0
  %2314 = vmatpush.bf16.msra.mxu0 0
  %2315 = vmatpush.bf16.msra.mxu0 0
  %2316 = vmatpush.bf16.msra.mxu0 0
  %2317 = vmatpush.bf16.msra.mxu0 0
  %2318 = vmatpush.bf16.msra.mxu0 0
  %2319 = vmatpush.bf16.msra.mxu0 0
  %2320 = vmatpush.bf16.msra.mxu0 0
  %2321 = vmatpush.bf16.msra.mxu0 %v2287
  %2322 = vmatmul.bf16.gmra.mxu0 %v2281
  %v2323 = vpop.f32.mrf.mxu0
  %v2324 = vadd.f32 0.0, %v2323
  %v2325 = vpop.f32.mrf.mxu0
  %2326 = vdwg.mxu0
  %2327 = vmatpush.bf16.msra.mxu0 0
  %2328 = vmatpush.bf16.msra.mxu0 0
  %2329 = vmatpush.bf16.msra.mxu0 0
  %2330 = vmatpush.bf16.msra.mxu0 0
  %2331 = vmatpush.bf16.msra.mxu0 0
  %2332 = vmatpush.bf16.msra.mxu0 0
  %2333 = vmatpush.bf16.msra.mxu0 0
  %2334 = vmatpush.bf16.msra.mxu0 %v2290
  %2335 = vmatmul.bf16.gmra.mxu0 %v2281
  %v2336 = vpop.f32.mrf.mxu0
  %v2337 = vadd.f32 0.0, %v2336
  %v2338 = vpop.f32.mrf.mxu0
  %2339 = vdwg.mxu0
  %2340 = vmatpush.bf16.msra.mxu0 0
  %2341 = vmatpush.bf16.msra.mxu0 0
  %2342 = vmatpush.bf16.msra.mxu0 0
  %2343 = vmatpush.bf16.msra.mxu0 0
  %2344 = vmatpush.bf16.msra.mxu0 0
  %2345 = vmatpush.bf16.msra.mxu0 0
  %2346 = vmatpush.bf16.msra.mxu0 0
  %2347 = vmatpush.bf16.msra.mxu0 %v2293
  %2348 = vmatmul.bf16.gmra.mxu0 %v2281
  %v2349 = vpop.f32.mrf.mxu0
  %v2350 = vadd.f32 0.0, %v2349
  %v2351 = vpop.f32.mrf.mxu0
  %2352 = vdwg.mxu0
  %2353 = vmatpush.bf16.msra.mxu0 0
  %2354 = vmatpush.bf16.msra.mxu0 0
  %2355 = vmatpush.bf16.msra.mxu0 0
  %2356 = vmatpush.bf16.msra.mxu0 0
  %2357 = vmatpush.bf16.msra.mxu0 0
  %2358 = vmatpush.bf16.msra.mxu0 0
  %2359 = vmatpush.bf16.msra.mxu0 0
  %2360 = vmatpush.bf16.msra.mxu0 %v2296
  %2361 = vmatmul.bf16.gmra.mxu0 %v2281
  %v2362 = vpop.f32.mrf.mxu0
  %v2363 = vadd.f32 0.0, %v2362
  %v2364 = vpop.f32.mrf.mxu0
  %2365 = vdwg.mxu0
  %2366 = vmatpush.bf16.msra.mxu0 0
  %2367 = vmatpush.bf16.msra.mxu0 0
  %2368 = vmatpush.bf16.msra.mxu0 0
  %2369 = vmatpush.bf16.msra.mxu0 0
  %2370 = vmatpush.bf16.msra.mxu0 0
  %2371 = vmatpush.bf16.msra.mxu0 0
  %2372 = vmatpush.bf16.msra.mxu0 0
  %2373 = vmatpush.bf16.msra.mxu0 %v2299
  %2374 = vmatmul.bf16.gmra.mxu0 %v2281
  %v2375 = vpop.f32.mrf.mxu0
  %v2376 = vadd.f32 0.0, %v2375
  %v2377 = vpop.f32.mrf.mxu0
  %2378 = vdwg.mxu0
  %v2379 = vadd.f32 %v2254, %v2311
  %v2380 = vadd.f32 %v2255, %v2324
  %v2381 = vadd.f32 %v2256, %v2337
  %v2382 = vadd.f32 %v2257, %v2350
  %v2383 = vadd.f32 %v2258, %v2363
  %v2384 = vadd.f32 %v2259, %v2376
  %v2385 = vld [vmem:[%s7] sm:$0xff]
  %2387 = vset.pattern.permute.xlu0 0
  %2388 = vperm.xlu0 %2387, %v2385
  %v2389 = vpop.permute.xlu0 %2388
  %v2391 = vadd.f32 %v2379, %v2389
  %v2392 = vadd.f32 %v2380, %v2389
  %v2393 = vadd.f32 %v2381, %v2389
  %v2394 = vadd.f32 %v2382, %v2389
  %v2395 = vadd.f32 %v2383, %v2389
  %v2396 = vadd.f32 %v2384, %v2389
  %2397 = vrot.lane.b32.xlu0 %v1173, 109
  %v2398 = vpop.permute.xlu0 %2397
  %2399 = vrot.lane.b32.xlu0 %v1174, 109
  %v2400 = vpop.permute.xlu0 %2399
  %2401 = vrot.lane.b32.xlu0 %v1175, 109
  %v2402 = vpop.permute.xlu0 %2401
  %2403 = vrot.lane.b32.xlu0 %v1176, 109
  %v2404 = vpop.permute.xlu0 %2403
  %2405 = vrot.lane.b32.xlu0 %v1177, 109
  %v2406 = vpop.permute.xlu0 %2405
  %2407 = vrot.lane.b32.xlu0 %v1178, 109
  %v2408 = vpop.permute.xlu0 %2407
  %vm2409 = vcmask 891904
  %v2410 = vsel %vm2409, %v2398, %v2400
  %v2411 = vsel %vm2409, %v2400, %v2402
  %v2412 = vsel %vm2409, %v2402, %v2404
  %v2413 = vsel %vm2409, %v2404, %v2406
  %v2414 = vsel %vm2409, %v2406, %v2408
  %v2421 = vmul.f32 %v2391, %v2410
  %v2422 = vmul.f32 %v2392, %v2411
  %v2423 = vmul.f32 %v2393, %v2412
  %v2424 = vmul.f32 %v2394, %v2413
  %v2425 = vmul.f32 %v2395, %v2414
  %v2426 = vmul.f32 %v2396, %v2408
  %v2427 = vadd.f32 %v2421, %v2422
  %v2428 = vadd.f32 %v2427, %v2423
  %v2429 = vadd.f32 %v2428, %v2424
  %v2430 = vadd.f32 %v2429, %v2425
  %v2431 = vsel %vm78, %v2426, 0.0
  %v2432 = vadd.f32 %v2430, %v2431
  %2433 = vadd.xlane.f32.xlu0 %v2432
  %v2434 = vpop.xlane.xlu0 %2433
  %v2435 = vmul.f32 %v2434, 0.001953125
  %v2436 = vsub.f32 %v2391, %v2435
  %v2437 = vsub.f32 %v2392, %v2435
  %v2438 = vsub.f32 %v2393, %v2435
  %v2439 = vsub.f32 %v2394, %v2435
  %v2440 = vsub.f32 %v2395, %v2435
  %v2441 = vsub.f32 %v2396, %v2435
  %v2442 = vmul.f32 %v2436, %v2436
  %v2443 = vmul.f32 %v2437, %v2437
  %v2444 = vmul.f32 %v2438, %v2438
  %v2445 = vmul.f32 %v2439, %v2439
  %v2446 = vmul.f32 %v2440, %v2440
  %v2447 = vmul.f32 %v2441, %v2441
  %v2448 = vmul.f32 %v2442, %v2410
  %v2449 = vmul.f32 %v2443, %v2411
  %v2450 = vmul.f32 %v2444, %v2412
  %v2451 = vmul.f32 %v2445, %v2413
  %v2452 = vmul.f32 %v2446, %v2414
  %v2453 = vmul.f32 %v2447, %v2408
  %v2454 = vadd.f32 %v2448, %v2449
  %v2455 = vadd.f32 %v2454, %v2450
  %v2456 = vadd.f32 %v2455, %v2451
  %v2457 = vadd.f32 %v2456, %v2452
  %v2458 = vsel %vm78, %v2453, 0.0
  %v2459 = vadd.f32 %v2457, %v2458
  %2460 = vadd.xlane.f32.xlu0 %v2459
  %v2461 = vpop.xlane.xlu0 %2460
  %v2462 = vmul.f32 %v2461, 0.001953125
  %v2463 = vld [vmem:[%s8] sm:$0xff]
  %v2464 = vadd.f32 %v2462, 1e-05
  %v2465 = vrsqrt.pop %v2464
  %v2466 = vmul.f32 %v2465, %v2464
  %v2467 = vmul.f32 %v2466, %v2465
  %v2468 = vmul.f32 0.5, %v2467
  %v2469 = vsub.f32 1.5, %v2468
  %v2470 = vmul.f32 %v2465, %v2469
  %vm2471 = vweird.f32 %v2464
  %vm2472 = vweird.f32 %v2465
  %vm2473 = vmor %vm2471, %vm2472
  %v2474 = vsel %vm2473, %v2465, %v2470
  %v2475 = vmul.f32 %v2463, %v2474
  %v2476 = vld [vmem:[%s9] sm:$0xff]
  %v2477 = vmul.f32 %v2435, %v2475
  %v2478 = vsub.f32 %v2476, %v2477
  %2480 = vset.pattern.permute.xlu0 0
  %2481 = vperm.xlu0 %2480, %v2475
  %v2482 = vpop.permute.xlu0 %2481
  %v2484 = vmul.f32 %v2391, %v2482
  %v2485 = vmul.f32 %v2392, %v2482
  %v2486 = vmul.f32 %v2393, %v2482
  %v2487 = vmul.f32 %v2394, %v2482
  %v2488 = vmul.f32 %v2395, %v2482
  %v2489 = vmul.f32 %v2396, %v2482
  %2491 = vset.pattern.permute.xlu0 0
  %2492 = vperm.xlu0 %2491, %v2478
  %v2493 = vpop.permute.xlu0 %2492
  %v2495 = vadd.f32 %v2484, %v2493
  %v2496 = vadd.f32 %v2485, %v2493
  %v2497 = vadd.f32 %v2486, %v2493
  %v2498 = vadd.f32 %v2487, %v2493
  %v2499 = vadd.f32 %v2488, %v2493
  %v2500 = vadd.f32 %v2489, %v2493
  %v2501 = vmax.f32 %v2495, 0.0
  %v2502 = vmax.f32 %v2496, 0.0
  %v2503 = vmax.f32 %v2497, 0.0
  %v2504 = vmax.f32 %v2498, 0.0
  %v2505 = vmax.f32 %v2499, 0.0
  %v2506 = vmax.f32 %v2500, 0.0
  %v2507 = vmul.f32 %v2501, %v2410
  %v2508 = vmul.f32 %v2502, %v2411
  %v2509 = vmul.f32 %v2503, %v2412
  %v2510 = vmul.f32 %v2504, %v2413
  %v2511 = vmul.f32 %v2505, %v2414
  %v2512 = vmul.f32 %v2506, %v2408
  %2513 = vst [vmem:[%s10] sm:$0xff] %v2507
  %2514 = vst [vmem:[%s10 + $0x8] sm:$0xff] %v2508
  %2515 = vst [vmem:[%s10 + $0x10] sm:$0xff] %v2509
  %2516 = vst [vmem:[%s10 + $0x18] sm:$0xff] %v2510
  %2517 = vst [vmem:[%s10 + $0x20] sm:$0xff] %v2511
  %2518 = vst.msk [vmem:[%s10 + $0x28] sm:$0xff] %vm78, %v2512
  // Predicated region
  $region42: #{decoder_block_forward.3} parent=0 // pred_check
    _
  $region43: #{decoder_block_forward.3} parent=0 // pred_check_branch
    %2520 = sbr.rel (0) target = $region45
  $region44: #{decoder_block_forward.3} parent=0 // pred_region
    _
  $region45: #{decoder_block_forward.3} parent=0 // pred_fallthru
    _
  // Predicated region
  $region46: #{decoder_block_forward.3} parent=0 // pred_check
    _
  $region47: #{decoder_block_forward.3} parent=0 // pred_check_branch
    %2522 = sbr.rel (0) target = $region49
  $region48: #{decoder_block_forward.3} parent=0 // pred_region
    _
  $region49: #{decoder_block_forward.3} parent=0 // pred_fallthru
    _

</llo_original>
